<compile_context>
chip_gen: v6e
topology: v6e:2x2x1
jax: 0.10.0
libtpu: 0.0.40
codegen_flags: <defaults>
</compile_context>

<pallas_src>
from functools import partial

import jax
import jax.numpy as jnp
from jax import lax
from jax.experimental import pallas as pl
from jax.experimental.pallas import tpu as pltpu


def _residual_attention_kernel(x_ref, wqkv_ref, wout_ref, bout_ref, o_ref,
                               *, heads, dim_head, scale, matmul_dtype):
    # x_ref:    (1, C, N)        one batch element, channels-first
    # wqkv_ref: (3*H*D, C)       to_qkv conv weight (kernel-size-1 squeezed)
    # wout_ref: (dim, H*D)       to_out conv weight
    # bout_ref: (dim, 1)         to_out conv bias (broadcast over N)
    # o_ref:    (1, dim, N)      lane-dense in N
    H, D = heads, dim_head
    mdt = matmul_dtype

    x = x_ref[0]                                       # (C, N)
    n = x.shape[-1]

    # ---- to_qkv: pointwise conv == Wqkv @ x (contract C), result (3HD, N)
    qkv = lax.dot_general(
        wqkv_ref[...].astype(mdt), x.astype(mdt),
        dimension_numbers=(((1,), (0,)), ((), ())),
        preferred_element_type=jnp.float32)
    qkv = qkv.reshape(3, H, D, n)
    q, k, v = qkv[0], qkv[1], qkv[2]                   # each (H, D, N)

    # ---- scores: sim[h, i, j] = sum_d q[h, d, i] * k[h, d, j]   (heads batched)
    sim = lax.dot_general(
        q.astype(mdt), k.astype(mdt),
        dimension_numbers=(((1,), (1,)), ((0,), (0,))),
        preferred_element_type=jnp.float32)            # (H, N, N)
    sim = sim * scale

    # ---- softmax over lane axis j (statistics kept in f32)
    sim = sim - jnp.max(sim, axis=-1, keepdims=True)
    p = jnp.exp(sim)
    denom = jnp.sum(p, axis=-1, keepdims=True)
    attn = p * pl.reciprocal(denom, approx=True)       # EUP vrcp, VALU-free

    # ---- out[h, d, i] = sum_j v[h, d, j] * attn[h, i, j]
    out = lax.dot_general(
        v.astype(mdt), attn.astype(mdt),
        dimension_numbers=(((2,), (2,)), ((0,), (0,))),
        preferred_element_type=jnp.float32)            # (H, D, N)
    out = out.reshape(H * D, n)                        # channel = h*D + d

    # ---- to_out projection + bias, then the residual add: fn(x) + x
    proj = lax.dot_general(
        wout_ref[...].astype(mdt), out.astype(mdt),
        dimension_numbers=(((1,), (0,)), ((), ())),
        preferred_element_type=jnp.float32)            # (dim, N)
    proj = proj + bout_ref[...]                        # (dim, 1) broadcast over N
    o_ref[0] = (proj + x.astype(jnp.float32)).astype(o_ref.dtype)


def residual_attention_forward(x_bcn, w_qkv, w_out, b_out, *, heads, dim_head,
                               matmul_dtype=jnp.float32):
    """Residual(Attention): x is (B, C, N) like the PyTorch module. Returns (B, C, N)."""
    b, c, n = x_bcn.shape
    dim = w_out.shape[0]
    hidden = heads * dim_head
    assert dim == c, "Residual add requires Attention output dim == input channels"
    scale = dim_head ** -0.5
    b_out_2d = b_out.reshape(dim, 1)

    kernel = partial(_residual_attention_kernel, heads=heads, dim_head=dim_head,
                     scale=scale, matmul_dtype=matmul_dtype)

    return pl.pallas_call(
        kernel,
        out_shape=jax.ShapeDtypeStruct((b, dim, n), x_bcn.dtype),
        grid_spec=pltpu.PrefetchScalarGridSpec(
            num_scalar_prefetch=0,
            grid=(b,),
            in_specs=[
                pl.BlockSpec((1, c, n), lambda i: (i, 0, 0)),
                pl.BlockSpec((3 * hidden, c), lambda i: (0, 0)),
                pl.BlockSpec((dim, hidden), lambda i: (0, 0)),
                pl.BlockSpec((dim, 1), lambda i: (0, 0)),
            ],
            out_specs=pl.BlockSpec((1, dim, n), lambda i: (i, 0, 0)),
        ),
        compiler_params=pltpu.CompilerParams(
            dimension_semantics=("parallel",)),
    )(x_bcn, w_qkv, w_out, b_out_2d)


def _reference(x_bcn, w_qkv, w_out, b_out, *, heads, dim_head):
    """Pure-JAX mirror of the PyTorch Residual(Attention) forward."""
    b, c, n = x_bcn.shape
    hidden = heads * dim_head
    scale = dim_head ** -0.5
    qkv = jnp.einsum('oc,bcn->bon', w_qkv, x_bcn)            # (B, 3HD, N)
    q, k, v = jnp.split(qkv, 3, axis=1)                      # each (B, HD, N)
    rearr = lambda t: t.reshape(b, heads, dim_head, n)       # (B, H, D, N)
    q, k, v = map(rearr, (q, k, v))
    q = q * scale
    sim = jnp.einsum('bhdi,bhdj->bhij', q, k)
    attn = jax.nn.softmax(sim, axis=-1)
    out = jnp.einsum('bhij,bhdj->bhid', attn, v)             # (B, H, N, D)
    out = jnp.transpose(out, (0, 1, 3, 2)).reshape(b, hidden, n)
    attn_out = jnp.einsum('oc,bcn->bon', w_out, out) + b_out[None, :, None]
    return attn_out + x_bcn                                   # residual


if __name__ == "__main__":
    dim, heads, dim_head = 32, 4, 32
    hidden = heads * dim_head
    batch, seq = 2, 128                                       # N multiple of 128 -> lane-dense

    key = jax.random.PRNGKey(0)
    kx, kq, ko, kb = jax.random.split(key, 4)

    x = jax.random.normal(kx, (batch, dim, seq), dtype=jnp.float32)
    # Conv1d(dim, hidden*3, 1, bias=False).weight -> (3*hidden, dim) after squeeze
    w_qkv = jax.random.normal(kq, (3 * hidden, dim), dtype=jnp.float32) * 0.05
    # Conv1d(hidden, dim, 1).weight -> (dim, hidden), bias -> (dim,)
    w_out = jax.random.normal(ko, (dim, hidden), dtype=jnp.float32) * 0.05
    b_out = jax.random.normal(kb, (dim,), dtype=jnp.float32) * 0.05

    out = residual_attention_forward(x, w_qkv, w_out, b_out,
                                     heads=heads, dim_head=dim_head)
    out = jax.block_until_ready(out)

    ref = _reference(x, w_qkv, w_out, b_out, heads=heads, dim_head=dim_head)
    assert out.shape == (batch, dim, seq)
    assert jnp.allclose(out, ref, atol=2e-3, rtol=2e-3)

    print("KERNEL_OK")
</pallas_src>

<mosaic_0001>
module attributes {stable_mosaic.version = 11 : i64} {
  func.func @_residual_attention_kernel(%arg0: i32, %arg1: memref<1x32x128xf32, #tpu.memory_space<vmem>>, %arg2: memref<384x32xf32, #tpu.memory_space<vmem>>, %arg3: memref<32x128xf32, #tpu.memory_space<vmem>>, %arg4: memref<32x1xf32, #tpu.memory_space<vmem>>, %arg5: memref<1x32x128xf32, #tpu.memory_space<vmem>>) attributes {dimension_semantics = [#tpu.dimension_semantics<parallel>], iteration_bounds = array<i64: 2>, scalar_prefetch = 0 : i64, scratch_operands = 0 : i64, tpu.core_type = #tpu.core_type<tc>, window_params = [{transform_indices = @transform_0, window_bounds = array<i64: 1, 32, 128>}, {pipeline_mode = #tpu.pipeline_mode<synchronous>, transform_indices = @transform_1, window_bounds = array<i64: 384, 32>}, {pipeline_mode = #tpu.pipeline_mode<synchronous>, transform_indices = @transform_2, window_bounds = array<i64: 32, 128>}, {pipeline_mode = #tpu.pipeline_mode<synchronous>, transform_indices = @transform_3, window_bounds = array<i64: 32, 1>}, {transform_indices = @transform_4, window_bounds = array<i64: 1, 32, 128>}]} {
    %c0 = arith.constant 0 : index
    %c0_0 = arith.constant 0 : index
    %c0_1 = arith.constant 0 : index
    %0 = vector.load %arg1[%c0, %c0_0, %c0_1] : memref<1x32x128xf32, #tpu.memory_space<vmem>>, vector<1x32x128xf32>
    %1 = vector.shape_cast %0 : vector<1x32x128xf32> to vector<32x128xf32>
    %c0_2 = arith.constant 0 : index
    %c0_3 = arith.constant 0 : index
    %2 = vector.load %arg2[%c0_2, %c0_3] : memref<384x32xf32, #tpu.memory_space<vmem>>, vector<384x32xf32>
    %cst = arith.constant dense<0.000000e+00> : vector<384x128xf32>
    %3 = tpu.matmul %2, %1, %cst {dimension_numbers = #tpu.dot_dimension_numbers<[1], [0], [0], [1], [0, 0, 1, 1], [], []>} : vector<384x32xf32>, vector<32x128xf32>, vector<384x128xf32> -> vector<384x128xf32>
    %4 = vector.shape_cast %3 : vector<384x128xf32> to vector<3x4x32x128xf32>
    %5 = vector.extract_strided_slice %4 {offsets = [0, 0, 0, 0], sizes = [1, 4, 32, 128], strides = [1, 1, 1, 1]} : vector<3x4x32x128xf32> to vector<1x4x32x128xf32>
    %6 = vector.shape_cast %5 : vector<1x4x32x128xf32> to vector<4x32x128xf32>
    %7 = vector.extract_strided_slice %4 {offsets = [1, 0, 0, 0], sizes = [1, 4, 32, 128], strides = [1, 1, 1, 1]} : vector<3x4x32x128xf32> to vector<1x4x32x128xf32>
    %8 = vector.shape_cast %7 : vector<1x4x32x128xf32> to vector<4x32x128xf32>
    %9 = vector.extract_strided_slice %4 {offsets = [2, 0, 0, 0], sizes = [1, 4, 32, 128], strides = [1, 1, 1, 1]} : vector<3x4x32x128xf32> to vector<1x4x32x128xf32>
    %10 = vector.shape_cast %9 : vector<1x4x32x128xf32> to vector<4x32x128xf32>
    %cst_4 = arith.constant dense<0.000000e+00> : vector<4x128x128xf32>
    %11 = tpu.matmul %6, %8, %cst_4 {dimension_numbers = #tpu.dot_dimension_numbers<[1], [1], [2], [2], [0, 0, 0, 2, 1, 2], [0], [0]>} : vector<4x32x128xf32>, vector<4x32x128xf32>, vector<4x128x128xf32> -> vector<4x128x128xf32>
    %cst_5 = arith.constant 0.176776692 : f32
    %12 = vector.broadcast %cst_5 : f32 to vector<4x128x128xf32>
    %13 = arith.mulf %11, %12 : vector<4x128x128xf32>
    %cst_6 = arith.constant dense<0xFF800000> : vector<4x128xf32>
    %14 = vector.multi_reduction <maximumf>, %13, %cst_6 [2] : vector<4x128x128xf32> to vector<4x128xf32>
    %15 = vector.shape_cast %14 : vector<4x128xf32> to vector<4x128x1xf32>
    %16 = vector.broadcast %15 : vector<4x128x1xf32> to vector<4x128x128xf32>
    %17 = arith.subf %13, %16 : vector<4x128x128xf32>
    %18 = math.exp %17 : vector<4x128x128xf32>
    %cst_7 = arith.constant dense<0.000000e+00> : vector<4x128xf32>
    %19 = vector.multi_reduction <add>, %18, %cst_7 [2] : vector<4x128x128xf32> to vector<4x128xf32>
    %20 = vector.shape_cast %19 : vector<4x128xf32> to vector<4x128x1xf32>
    %21 = tpu.reciprocal %20 {approx = true} : vector<4x128x1xf32> -> vector<4x128x1xf32>
    %22 = vector.broadcast %21 : vector<4x128x1xf32> to vector<4x128x128xf32>
    %23 = arith.mulf %18, %22 : vector<4x128x128xf32>
    %cst_8 = arith.constant dense<0.000000e+00> : vector<4x32x128xf32>
    %24 = tpu.matmul %10, %23, %cst_8 {dimension_numbers = #tpu.dot_dimension_numbers<[2], [2], [1], [1], [0, 0, 0, 1, 1, 1], [0], [0]>} : vector<4x32x128xf32>, vector<4x128x128xf32>, vector<4x32x128xf32> -> vector<4x32x128xf32>
    %25 = vector.shape_cast %24 : vector<4x32x128xf32> to vector<128x128xf32>
    %c0_9 = arith.constant 0 : index
    %c0_10 = arith.constant 0 : index
    %26 = vector.load %arg3[%c0_9, %c0_10] : memref<32x128xf32, #tpu.memory_space<vmem>>, vector<32x128xf32>
    %cst_11 = arith.constant dense<0.000000e+00> : vector<32x128xf32>
    %27 = tpu.matmul %26, %25, %cst_11 {dimension_numbers = #tpu.dot_dimension_numbers<[1], [0], [0], [1], [0, 0, 1, 1], [], []>} : vector<32x128xf32>, vector<128x128xf32>, vector<32x128xf32> -> vector<32x128xf32>
    %c0_12 = arith.constant 0 : index
    %c0_13 = arith.constant 0 : index
    %28 = vector.load %arg4[%c0_12, %c0_13] : memref<32x1xf32, #tpu.memory_space<vmem>>, vector<32x1xf32>
    %29 = vector.broadcast %28 : vector<32x1xf32> to vector<32x128xf32>
    %30 = arith.addf %27, %29 : vector<32x128xf32>
    %31 = arith.addf %30, %1 : vector<32x128xf32>
    %c0_14 = arith.constant 0 : index
    %c0_15 = arith.constant 0 : index
    %c0_16 = arith.constant 0 : index
    %32 = vector.load %arg5[%c0_14, %c0_15, %c0_16] : memref<1x32x128xf32, #tpu.memory_space<vmem>>, vector<1x32x128xf32>
    %33 = vector.shape_cast %32 : vector<1x32x128xf32> to vector<32x128xf32>
    %34 = vector.shape_cast %31 : vector<32x128xf32> to vector<1x32x128xf32>
    tpu.vector_store %arg5[%c0_14, %c0_15, %c0_16], %34 {strides = array<i32>} : memref<1x32x128xf32, #tpu.memory_space<vmem>>, vector<1x32x128xf32>,
    return
  }
  func.func @transform_0(%arg0: i32) -> (i32, i32, i32) {
    %c0_i32 = arith.constant 0 : i32
    %c0_i32_0 = arith.constant 0 : i32
    %c0_i32_1 = arith.constant 0 : i32
    return %arg0, %c0_i32, %c0_i32_0 : i32, i32, i32
  }
  func.func @transform_1(%arg0: i32) -> (i32, i32) {
    %c0_i32 = arith.constant 0 : i32
    %c0_i32_0 = arith.constant 0 : i32
    %c0_i32_1 = arith.constant 0 : i32
    return %c0_i32, %c0_i32_0 : i32, i32
  }
  func.func @transform_2(%arg0: i32) -> (i32, i32) {
    %c0_i32 = arith.constant 0 : i32
    %c0_i32_0 = arith.constant 0 : i32
    %c0_i32_1 = arith.constant 0 : i32
    return %c0_i32, %c0_i32_0 : i32, i32
  }
  func.func @transform_3(%arg0: i32) -> (i32, i32) {
    %c0_i32 = arith.constant 0 : i32
    %c0_i32_0 = arith.constant 0 : i32
    %c0_i32_1 = arith.constant 0 : i32
    return %c0_i32, %c0_i32_0 : i32, i32
  }
  func.func @transform_4(%arg0: i32) -> (i32, i32, i32) {
    %c0_i32 = arith.constant 0 : i32
    %c0_i32_0 = arith.constant 0 : i32
    %c0_i32_1 = arith.constant 0 : i32
    return %arg0, %c0_i32, %c0_i32_0 : i32, i32, i32
  }
}

</mosaic_0001>

<llo_original>
// kernel: tpu_custom_call.1
$region0: #{tpu_custom_call.1}
  #allocation0 [shape = 'u32[]', space=smem, size = 0x4, offset = 0x4, fixed_abs, tag = 'smem constant byte address 0x4 - core index']
  #allocation1 [shape = 'u32[144,128]{1,0:T(1,128)}', space=vmem, size = 0x12000, scoped, tag = 'internal scratch']
  %s0 = inlined_call_operand.vmem [shape: f32[2,32,128], index: 0, kind: input, shape index: {}]
  %s1 = inlined_call_operand.vmem [shape: f32[384,32], index: 1, kind: input, shape index: {}]
  %s2 = inlined_call_operand.vmem [shape: f32[32,128], index: 2, kind: input, shape index: {}]
  %s3 = inlined_call_operand.vmem [shape: f32[32,1], index: 3, kind: input, shape index: {}]
  %s4 = inlined_call_operand.hbm [shape: f32[2,32,128], index: 4, kind: output, shape index: {}]
  %s5 = sld [smem:[#allocation0]]
  $region49: #{tpu_custom_call.1} parent=0
    _
  %s7 = ssub.s32 1, %s5
  %s8 = scalar_select 0, %s7, %s5
  $region1: #{tpu_custom_call.1} parent=0
    #allocation2 [shape = 'u8[32768]{0}', space=vmem, size = 0x8000, scoped, tag = 'output window, operand 0']
    #allocation3 [shape = 's32[2]{0}', space=sflag, size = 0x8, scoped, tag = 'scoped memory for tpu_custom_call.1']
    %9 = vsyncpa [#allocation3], 0
    %s10 = scalar_lea.sflag [#allocation3], 1
    %11 = vsyncpa %s10, 0
    loop: start=0, step=1, limit=4
    $region2: #{tpu_custom_call.1} parent=1 // loop_pre_header
      _
    $region3: #{tpu_custom_call.1} parent=1 // loop_header
      %s13 = sphi 0, %s17
      %p14 = scmp.ge.s32.totalorder %s13, 4
      %s23 = sphi 0, %s25
      %s26 = sphi 0, %s23
      %s27 = sphi 0, %s26
      %s43 = sphi 0, %s27
      %s47 = sphi 0, %s47
      %s49 = sphi 0, %s47
      %s50 = sphi 0, %s49
      %s64 = sphi 0, %s50
      %s68 = sphi 0, %s68
      %s70 = sphi 0, %s68
      %s71 = sphi 0, %s70
      %s85 = sphi 0, %s71
      %s89 = sphi 0, %s89
      %s91 = sphi 0, %s89
      %s92 = sphi 0, %s91
      %s106 = sphi 0, %s92
      %s112 = sphi 0, %s114
      %s115 = sphi 0, %s112
      %s116 = sphi 0, %s115
      %s132 = sphi 0, %s116
    $region4: #{tpu_custom_call.1} parent=1 // loop_header_branch
      %16 = sbr.rel (%p14) target = $region8
    $region5: #{tpu_custom_call.1} parent=1 // loop_body
      %s18 = ssub.s32 %s13, 1
      %s19 = ssub.s32 %s13, 2
      %s20 = sadd.s32 %s13, 1
      %s21 = ssub.s32 %s13, %s20
      %p22 = scmp.eq.s32.totalorder %s21, 0
      %s24 = sadd.s32 %s23, 1
      %s25 = scalar_select %p22, %s23, %s24
      %p28 = pneg %p22
      %p29 = scmp.eq.s32.totalorder %s13, 1
      %p30 = por %p28, %p29
      %p31 = scmp.ne.s32.totalorder %s23, %s26
      %p32 = scmp.eq.s32.totalorder %s13, 0
      %p33 = por %p31, %p32
      %p34 = scmp.ne.s32.totalorder %s23, %s26
      %p35 = scmp.eq.s32.totalorder %s18, 1
      %p36 = por %p34, %p35
      %p37 = scmp.ne.s32.totalorder %s26, %s27
      %p38 = scmp.eq.s32.totalorder %s18, 0
      %p39 = por %p37, %p38
      %p40 = scmp.ne.s32.totalorder %s26, %s27
      %p41 = scmp.eq.s32.totalorder %s19, 1
      %p42 = por %p40, %p41
      %p44 = scmp.ne.s32.totalorder %s27, %s43
      %p45 = scmp.eq.s32.totalorder %s19, 0
      %p46 = por %p44, %p45
      %s48 = sadd.s32 %s47, 1
      %p51 = scmp.eq.s32.totalorder %s13, 1
      %p52 = scmp.ne.s32.totalorder %s47, %s49
      %p53 = scmp.eq.s32.totalorder %s13, 0
      %p54 = por %p52, %p53
      %p55 = scmp.ne.s32.totalorder %s47, %s49
      %p56 = scmp.eq.s32.totalorder %s18, 1
      %p57 = por %p55, %p56
      %p58 = scmp.ne.s32.totalorder %s49, %s50
      %p59 = scmp.eq.s32.totalorder %s18, 0
      %p60 = por %p58, %p59
      %p61 = scmp.ne.s32.totalorder %s49, %s50
      %p62 = scmp.eq.s32.totalorder %s19, 1
      %p63 = por %p61, %p62
      %p65 = scmp.ne.s32.totalorder %s50, %s64
      %p66 = scmp.eq.s32.totalorder %s19, 0
      %p67 = por %p65, %p66
      %s69 = sadd.s32 %s68, 1
      %p72 = scmp.eq.s32.totalorder %s13, 1
      %p73 = scmp.ne.s32.totalorder %s68, %s70
      %p74 = scmp.eq.s32.totalorder %s13, 0
      %p75 = por %p73, %p74
      %p76 = scmp.ne.s32.totalorder %s68, %s70
      %p77 = scmp.eq.s32.totalorder %s18, 1
      %p78 = por %p76, %p77
      %p79 = scmp.ne.s32.totalorder %s70, %s71
      %p80 = scmp.eq.s32.totalorder %s18, 0
      %p81 = por %p79, %p80
      %p82 = scmp.ne.s32.totalorder %s70, %s71
      %p83 = scmp.eq.s32.totalorder %s19, 1
      %p84 = por %p82, %p83
      %p86 = scmp.ne.s32.totalorder %s71, %s85
      %p87 = scmp.eq.s32.totalorder %s19, 0
      %p88 = por %p86, %p87
      %s90 = sadd.s32 %s89, 1
      %p93 = scmp.eq.s32.totalorder %s13, 1
      %p94 = scmp.ne.s32.totalorder %s89, %s91
      %p95 = scmp.eq.s32.totalorder %s13, 0
      %p96 = por %p94, %p95
      %p97 = scmp.ne.s32.totalorder %s89, %s91
      %p98 = scmp.eq.s32.totalorder %s18, 1
      %p99 = por %p97, %p98
      %p100 = scmp.ne.s32.totalorder %s91, %s92
      %p101 = scmp.eq.s32.totalorder %s18, 0
      %p102 = por %p100, %p101
      %p103 = scmp.ne.s32.totalorder %s91, %s92
      %p104 = scmp.eq.s32.totalorder %s19, 1
      %p105 = por %p103, %p104
      %p107 = scmp.ne.s32.totalorder %s92, %s106
      %p108 = scmp.eq.s32.totalorder %s19, 0
      %p109 = por %p107, %p108
      %s110 = ssub.s32 %s13, %s20
      %p111 = scmp.eq.s32.totalorder %s110, 0
      %s113 = sadd.s32 %s112, 1
      %s114 = scalar_select %p111, %s112, %s113
      %p117 = pneg %p111
      %p118 = scmp.eq.s32.totalorder %s13, 1
      %p119 = por %p117, %p118
      %p120 = scmp.ne.s32.totalorder %s112, %s115
      %p121 = scmp.eq.s32.totalorder %s13, 0
      %p122 = por %p120, %p121
      %p123 = scmp.ne.s32.totalorder %s112, %s115
      %p124 = scmp.eq.s32.totalorder %s18, 1
      %p125 = por %p123, %p124
      %p126 = scmp.ne.s32.totalorder %s115, %s116
      %p127 = scmp.eq.s32.totalorder %s18, 0
      %p128 = por %p126, %p127
      %p129 = scmp.ne.s32.totalorder %s115, %s116
      %p130 = scmp.eq.s32.totalorder %s19, 1
      %p131 = por %p129, %p130
      %p133 = scmp.ne.s32.totalorder %s116, %s132
      %p134 = scmp.eq.s32.totalorder %s19, 0
      %p135 = por %p133, %p134
      %p136 = scmp.le.s32.totalorder 1, %s13
      %p137 = scmp.lt.s32.totalorder %s13, 3
      %p138 = pnand %p136, %p137
      %p139 = pneg %p138
      // Predicated region
      $region9: #{tpu_custom_call.1} parent=5 // pred_check
        _
      $region10: #{tpu_custom_call.1} parent=5 // pred_check_branch
        %141 = sbr.rel (%p138) target = $region12
      $region11: #{tpu_custom_call.1} parent=5 // pred_region
        %s142 = ssub.s32 %s13, 1
        // Predicated region
        $region13: #{tpu_custom_call.1} parent=11 // pred_check
          %p143 = pneg %p60
        $region14: #{tpu_custom_call.1} parent=11 // pred_check_branch
          %145 = sbr.rel (%p143) target = $region16
        $region15: #{tpu_custom_call.1} parent=11 // pred_region
          _
        $region16: #{tpu_custom_call.1} parent=11 // pred_fallthru
          _
        // Predicated region
        $region17: #{tpu_custom_call.1} parent=11 // pred_check
          %p146 = pneg %p81
        $region18: #{tpu_custom_call.1} parent=11 // pred_check_branch
          %148 = sbr.rel (%p146) target = $region20
        $region19: #{tpu_custom_call.1} parent=11 // pred_region
          _
        $region20: #{tpu_custom_call.1} parent=11 // pred_fallthru
          _
        // Predicated region
        $region21: #{tpu_custom_call.1} parent=11 // pred_check
          %p149 = pneg %p102
        $region22: #{tpu_custom_call.1} parent=11 // pred_check_branch
          %151 = sbr.rel (%p149) target = $region24
        $region23: #{tpu_custom_call.1} parent=11 // pred_region
          _
        $region24: #{tpu_custom_call.1} parent=11 // pred_fallthru
          _
      $region12: #{tpu_custom_call.1} parent=5 // pred_fallthru
        _
      %p152 = scmp.lt.s32.totalorder %s13, 2
      // Predicated region
      $region25: #{tpu_custom_call.1} parent=5 // pred_check
        %p153 = pneg %p152
      $region26: #{tpu_custom_call.1} parent=5 // pred_check_branch
        %155 = sbr.rel (%p153) target = $region28
      $region27: #{tpu_custom_call.1} parent=5 // pred_region
        // Predicated region
        $region29: #{tpu_custom_call.1} parent=27 // pred_check
          %p156 = pneg %p33
        $region30: #{tpu_custom_call.1} parent=27 // pred_check_branch
          %158 = sbr.rel (%p156) target = $region32
        $region31: #{tpu_custom_call.1} parent=27 // pred_region
          %p159 = scmp.lt.s32.totalorder %s13, 1
          %s160 = scalar_select %p159, %s13, 1
          %s161 = smul.addr %s160, 4
          %s162 = smul.addr %s161, 8
          %s163 = scalar_lea.vmem %s0, %s162
        $region32: #{tpu_custom_call.1} parent=27 // pred_fallthru
          _
      $region28: #{tpu_custom_call.1} parent=5 // pred_fallthru
        _
      %p164 = scmp.le.s32.totalorder 1, %s13
      %p165 = scmp.lt.s32.totalorder %s13, 3
      %p166 = pnand %p164, %p165
      %p167 = pneg %p166
      // Predicated region
      $region33: #{tpu_custom_call.1} parent=5 // pred_check
        _
      $region34: #{tpu_custom_call.1} parent=5 // pred_check_branch
        %169 = sbr.rel (%p166) target = $region36
      $region35: #{tpu_custom_call.1} parent=5 // pred_region
        %s170 = ssub.s32 %s13, 1
        %p171 = scmp.lt.s32.totalorder %s18, 1
        %s172 = scalar_select %p171, %s18, 1
        %s173 = smul.addr %s172, 4
        %s174 = smul.addr %s173, 8
        %s175 = scalar_lea.vmem %s0, %s174
        %p176 = pneg %p39
        %p177 = pneg %p36
        %p178 = pneg %p60
        %p179 = pneg %p57
        %p180 = pneg %p81
        %p181 = pneg %p78
        %p182 = pneg %p102
        %p183 = pneg %p99
        %p184 = pneg %p128
        %p185 = pneg %p125
        %s186 = sand.u32 %s115, 1
        %s187 = scalar_lea.sflag [#allocation3], %s186
        %s188 = sand.u32 %s115, 1
        %s189 = smul.addr %s188, 32
        %s190 = scalar_lea.vmem [#allocation2], %s189
        %p191 = scmp.lt.s32.totalorder %s18, 1
        %s192 = scalar_select %p191, %s18, 1
        %s193 = smul.addr %s192, 4
        %s194 = smul.addr %s193, 8
        %s195 = scalar_lea.vmem %s0, %s194
        %v196 = vld [vmem:[%s195] sm:$0xff]
        %v197 = vld [vmem:[%s195 + $0x8] sm:$0xff]
        %v198 = vld [vmem:[%s195 + $0x10] sm:$0xff]
        %v199 = vld [vmem:[%s195 + $0x18] sm:$0xff]
        %v200 = vld [vmem:[%s1] sm:$0xff]
        %v201 = vld [vmem:[%s1 + $0x8] sm:$0xff]
        %v202 = vld [vmem:[%s1 + $0x10] sm:$0xff]
        %v203 = vld [vmem:[%s1 + $0x18] sm:$0xff]
        %v204 = vld [vmem:[%s1 + $0x20] sm:$0xff]
        %v205 = vld [vmem:[%s1 + $0x28] sm:$0xff]
        %v206 = vld [vmem:[%s1 + $0x30] sm:$0xff]
        %v207 = vld [vmem:[%s1 + $0x38] sm:$0xff]
        %v208 = vld [vmem:[%s1 + $0x40] sm:$0xff]
        %v209 = vld [vmem:[%s1 + $0x48] sm:$0xff]
        %v210 = vld [vmem:[%s1 + $0x50] sm:$0xff]
        %v211 = vld [vmem:[%s1 + $0x58] sm:$0xff]
        %v212 = vld [vmem:[%s1 + $0x60] sm:$0xff]
        %v213 = vld [vmem:[%s1 + $0x68] sm:$0xff]
        %v214 = vld [vmem:[%s1 + $0x70] sm:$0xff]
        %v215 = vld [vmem:[%s1 + $0x78] sm:$0xff]
        %v216 = vld [vmem:[%s1 + $0x80] sm:$0xff]
        %v217 = vld [vmem:[%s1 + $0x88] sm:$0xff]
        %v218 = vld [vmem:[%s1 + $0x90] sm:$0xff]
        %v219 = vld [vmem:[%s1 + $0x98] sm:$0xff]
        %v220 = vld [vmem:[%s1 + $0xa0] sm:$0xff]
        %v221 = vld [vmem:[%s1 + $0xa8] sm:$0xff]
        %v222 = vld [vmem:[%s1 + $0xb0] sm:$0xff]
        %v223 = vld [vmem:[%s1 + $0xb8] sm:$0xff]
        %v224 = vld [vmem:[%s1 + $0xc0] sm:$0xff]
        %v225 = vld [vmem:[%s1 + $0xc8] sm:$0xff]
        %v226 = vld [vmem:[%s1 + $0xd0] sm:$0xff]
        %v227 = vld [vmem:[%s1 + $0xd8] sm:$0xff]
        %v228 = vld [vmem:[%s1 + $0xe0] sm:$0xff]
        %v229 = vld [vmem:[%s1 + $0xe8] sm:$0xff]
        %v230 = vld [vmem:[%s1 + $0xf0] sm:$0xff]
        %v231 = vld [vmem:[%s1 + $0xf8] sm:$0xff]
        %v232 = vld [vmem:[%s1 + $0x100] sm:$0xff]
        %v233 = vld [vmem:[%s1 + $0x108] sm:$0xff]
        %v234 = vld [vmem:[%s1 + $0x110] sm:$0xff]
        %v235 = vld [vmem:[%s1 + $0x118] sm:$0xff]
        %v236 = vld [vmem:[%s1 + $0x120] sm:$0xff]
        %v237 = vld [vmem:[%s1 + $0x128] sm:$0xff]
        %v238 = vld [vmem:[%s1 + $0x130] sm:$0xff]
        %v239 = vld [vmem:[%s1 + $0x138] sm:$0xff]
        %v240 = vld [vmem:[%s1 + $0x140] sm:$0xff]
        %v241 = vld [vmem:[%s1 + $0x148] sm:$0xff]
        %v242 = vld [vmem:[%s1 + $0x150] sm:$0xff]
        %v243 = vld [vmem:[%s1 + $0x158] sm:$0xff]
        %v244 = vld [vmem:[%s1 + $0x160] sm:$0xff]
        %v245 = vld [vmem:[%s1 + $0x168] sm:$0xff]
        %v246 = vld [vmem:[%s1 + $0x170] sm:$0xff]
        %v247 = vld [vmem:[%s1 + $0x178] sm:$0xff]
        %vm248 = vcmask 261120
        %v250 = vsel %vm248, %v200, 0
        %v253 = vsel %vm248, %v201, 0
        %v256 = vsel %vm248, %v202, 0
        %v259 = vsel %vm248, %v203, 0
        %v262 = vsel %vm248, %v204, 0
        %v265 = vsel %vm248, %v205, 0
        %v268 = vsel %vm248, %v206, 0
        %v271 = vsel %vm248, %v207, 0
        %v274 = vsel %vm248, %v208, 0
        %v277 = vsel %vm248, %v209, 0
        %v280 = vsel %vm248, %v210, 0
        %v283 = vsel %vm248, %v211, 0
        %v286 = vsel %vm248, %v212, 0
        %v289 = vsel %vm248, %v213, 0
        %v292 = vsel %vm248, %v214, 0
        %v295 = vsel %vm248, %v215, 0
        %v298 = vsel %vm248, %v216, 0
        %v301 = vsel %vm248, %v217, 0
        %v304 = vsel %vm248, %v218, 0
        %v307 = vsel %vm248, %v219, 0
        %v310 = vsel %vm248, %v220, 0
        %v313 = vsel %vm248, %v221, 0
        %v316 = vsel %vm248, %v222, 0
        %v319 = vsel %vm248, %v223, 0
        %v322 = vsel %vm248, %v224, 0
        %v325 = vsel %vm248, %v225, 0
        %v328 = vsel %vm248, %v226, 0
        %v331 = vsel %vm248, %v227, 0
        %v334 = vsel %vm248, %v228, 0
        %v337 = vsel %vm248, %v229, 0
        %v340 = vsel %vm248, %v230, 0
        %v343 = vsel %vm248, %v231, 0
        %v346 = vsel %vm248, %v232, 0
        %v349 = vsel %vm248, %v233, 0
        %v352 = vsel %vm248, %v234, 0
        %v355 = vsel %vm248, %v235, 0
        %v358 = vsel %vm248, %v236, 0
        %v361 = vsel %vm248, %v237, 0
        %v364 = vsel %vm248, %v238, 0
        %v367 = vsel %vm248, %v239, 0
        %v370 = vsel %vm248, %v240, 0
        %v373 = vsel %vm248, %v241, 0
        %v376 = vsel %vm248, %v242, 0
        %v379 = vsel %vm248, %v243, 0
        %v382 = vsel %vm248, %v244, 0
        %v385 = vsel %vm248, %v245, 0
        %v388 = vsel %vm248, %v246, 0
        %v391 = vsel %vm248, %v247, 0
        %393 = vmatprep.subr.mxu0 0.0
        %394 = vmatpush1.msra.mxu0 0.0
        %395 = vmatprep.subr.mxu0 0.0
        %396 = vmatpush1.msra.mxu0 0.0
        %397 = vmatprep.subr.mxu0 0.0
        %398 = vmatpush1.msra.mxu0 0.0
        %399 = vmatprep.subr.mxu0 0.0
        %400 = vmatpush1.msra.mxu0 0.0
        %401 = vmatprep.subr.mxu0 0.0
        %402 = vmatpush1.msra.mxu0 0.0
        %403 = vmatprep.subr.mxu0 0.0
        %404 = vmatpush1.msra.mxu0 0.0
        %405 = vmatprep.subr.mxu0 0.0
        %406 = vmatpush1.msra.mxu0 0.0
        %407 = vmatprep.subr.mxu0 0.0
        %408 = vmatpush1.msra.mxu0 0.0
        %409 = vmatprep.subr.mxu0 0.0
        %410 = vmatpush1.msra.mxu0 0.0
        %411 = vmatprep.subr.mxu0 0.0
        %412 = vmatpush1.msra.mxu0 0.0
        %413 = vmatprep.subr.mxu0 0.0
        %414 = vmatpush1.msra.mxu0 0.0
        %415 = vmatprep.subr.mxu0 0.0
        %416 = vmatpush1.msra.mxu0 0.0
        %417 = vmatprep.subr.mxu0 0.0
        %418 = vmatpush1.msra.mxu0 %v199
        %419 = vmatprep.subr.mxu0 0.0
        %420 = vmatpush1.msra.mxu0 %v198
        %421 = vmatprep.subr.mxu0 0.0
        %422 = vmatpush1.msra.mxu0 %v197
        %423 = vmatprep.subr.mxu0 0.0
        %424 = vmatpush1.msra.mxu0 %v196
        %425 = vmatprep.subr.mxu0 0.0
        %426 = vmatpush2.msra.mxu0 0.0
        %427 = vmatprep.subr.mxu0 0.0
        %428 = vmatpush2.msra.mxu0 0.0
        %429 = vmatprep.subr.mxu0 0.0
        %430 = vmatpush2.msra.mxu0 0.0
        %431 = vmatprep.subr.mxu0 0.0
        %432 = vmatpush2.msra.mxu0 0.0
        %433 = vmatprep.subr.mxu0 0.0
        %434 = vmatpush2.msra.mxu0 0.0
        %435 = vmatprep.subr.mxu0 0.0
        %436 = vmatpush2.msra.mxu0 0.0
        %437 = vmatprep.subr.mxu0 0.0
        %438 = vmatpush2.msra.mxu0 0.0
        %439 = vmatprep.subr.mxu0 0.0
        %440 = vmatpush2.msra.mxu0 0.0
        %441 = vmatprep.subr.mxu0 0.0
        %442 = vmatpush2.msra.mxu0 0.0
        %443 = vmatprep.subr.mxu0 0.0
        %444 = vmatpush2.msra.mxu0 0.0
        %445 = vmatprep.subr.mxu0 0.0
        %446 = vmatpush2.msra.mxu0 0.0
        %447 = vmatprep.subr.mxu0 0.0
        %448 = vmatpush2.msra.mxu0 0.0
        %449 = vmatprep.subr.mxu0 0.0
        %450 = vmatpush2.msra.mxu0 0.0
        %451 = vmatprep.subr.mxu0 0.0
        %452 = vmatpush2.msra.mxu0 0.0
        %453 = vmatprep.subr.mxu0 0.0
        %454 = vmatpush2.msra.mxu0 0.0
        %455 = vmatprep.subr.mxu0 0.0
        %456 = vmatpush2.msra.mxu0 0.0
        %457 = vmatprep.mubr.f32.mxu0 0.0
        %458 = vmatmul.mubr.f32.gmra.mxu0 %v250
        %v459 = vpop.f32.mrf.mxu0
        %v460 = vadd.f32 0.0, %v459
        %v461 = vpop.f32.mrf.mxu0
        %462 = vmatprep.mubr.f32.mxu0 0.0
        %463 = vmatmul.mubr.f32.gmra.mxu0 %v253
        %v464 = vpop.f32.mrf.mxu0
        %v465 = vadd.f32 0.0, %v464
        %v466 = vpop.f32.mrf.mxu0
        %467 = vmatprep.mubr.f32.mxu0 0.0
        %468 = vmatmul.mubr.f32.gmra.mxu0 %v256
        %v469 = vpop.f32.mrf.mxu0
        %v470 = vadd.f32 0.0, %v469
        %v471 = vpop.f32.mrf.mxu0
        %472 = vmatprep.mubr.f32.mxu0 0.0
        %473 = vmatmul.mubr.f32.gmra.mxu0 %v259
        %v474 = vpop.f32.mrf.mxu0
        %v475 = vadd.f32 0.0, %v474
        %v476 = vpop.f32.mrf.mxu0
        %477 = vmatprep.mubr.f32.mxu0 0.0
        %478 = vmatmul.mubr.f32.gmra.mxu0 %v262
        %v479 = vpop.f32.mrf.mxu0
        %v480 = vadd.f32 0.0, %v479
        %v481 = vpop.f32.mrf.mxu0
        %482 = vmatprep.mubr.f32.mxu0 0.0
        %483 = vmatmul.mubr.f32.gmra.mxu0 %v265
        %v484 = vpop.f32.mrf.mxu0
        %v485 = vadd.f32 0.0, %v484
        %v486 = vpop.f32.mrf.mxu0
        %487 = vmatprep.mubr.f32.mxu0 0.0
        %488 = vmatmul.mubr.f32.gmra.mxu0 %v268
        %v489 = vpop.f32.mrf.mxu0
        %v490 = vadd.f32 0.0, %v489
        %v491 = vpop.f32.mrf.mxu0
        %492 = vmatprep.mubr.f32.mxu0 0.0
        %493 = vmatmul.mubr.f32.gmra.mxu0 %v271
        %v494 = vpop.f32.mrf.mxu0
        %v495 = vadd.f32 0.0, %v494
        %v496 = vpop.f32.mrf.mxu0
        %497 = vmatprep.mubr.f32.mxu0 0.0
        %498 = vmatmul.mubr.f32.gmra.mxu0 %v274
        %v499 = vpop.f32.mrf.mxu0
        %v500 = vadd.f32 0.0, %v499
        %v501 = vpop.f32.mrf.mxu0
        %502 = vmatprep.mubr.f32.mxu0 0.0
        %503 = vmatmul.mubr.f32.gmra.mxu0 %v277
        %v504 = vpop.f32.mrf.mxu0
        %v505 = vadd.f32 0.0, %v504
        %v506 = vpop.f32.mrf.mxu0
        %507 = vmatprep.mubr.f32.mxu0 0.0
        %508 = vmatmul.mubr.f32.gmra.mxu0 %v280
        %v509 = vpop.f32.mrf.mxu0
        %v510 = vadd.f32 0.0, %v509
        %v511 = vpop.f32.mrf.mxu0
        %512 = vmatprep.mubr.f32.mxu0 0.0
        %513 = vmatmul.mubr.f32.gmra.mxu0 %v283
        %v514 = vpop.f32.mrf.mxu0
        %v515 = vadd.f32 0.0, %v514
        %v516 = vpop.f32.mrf.mxu0
        %517 = vmatprep.mubr.f32.mxu0 0.0
        %518 = vmatmul.mubr.f32.gmra.mxu0 %v286
        %v519 = vpop.f32.mrf.mxu0
        %v520 = vadd.f32 0.0, %v519
        %v521 = vpop.f32.mrf.mxu0
        %522 = vmatprep.mubr.f32.mxu0 0.0
        %523 = vmatmul.mubr.f32.gmra.mxu0 %v289
        %v524 = vpop.f32.mrf.mxu0
        %v525 = vadd.f32 0.0, %v524
        %v526 = vpop.f32.mrf.mxu0
        %527 = vmatprep.mubr.f32.mxu0 0.0
        %528 = vmatmul.mubr.f32.gmra.mxu0 %v292
        %v529 = vpop.f32.mrf.mxu0
        %v530 = vadd.f32 0.0, %v529
        %v531 = vpop.f32.mrf.mxu0
        %532 = vmatprep.mubr.f32.mxu0 0.0
        %533 = vmatmul.mubr.f32.gmra.mxu0 %v295
        %v534 = vpop.f32.mrf.mxu0
        %v535 = vadd.f32 0.0, %v534
        %v536 = vpop.f32.mrf.mxu0
        %537 = vmatprep.mubr.f32.mxu0 0.0
        %538 = vmatmul.mubr.f32.gmra.mxu0 %v298
        %v539 = vpop.f32.mrf.mxu0
        %v540 = vadd.f32 0.0, %v539
        %v541 = vpop.f32.mrf.mxu0
        %542 = vmatprep.mubr.f32.mxu0 0.0
        %543 = vmatmul.mubr.f32.gmra.mxu0 %v301
        %v544 = vpop.f32.mrf.mxu0
        %v545 = vadd.f32 0.0, %v544
        %v546 = vpop.f32.mrf.mxu0
        %547 = vmatprep.mubr.f32.mxu0 0.0
        %548 = vmatmul.mubr.f32.gmra.mxu0 %v304
        %v549 = vpop.f32.mrf.mxu0
        %v550 = vadd.f32 0.0, %v549
        %v551 = vpop.f32.mrf.mxu0
        %552 = vmatprep.mubr.f32.mxu0 0.0
        %553 = vmatmul.mubr.f32.gmra.mxu0 %v307
        %v554 = vpop.f32.mrf.mxu0
        %v555 = vadd.f32 0.0, %v554
        %v556 = vpop.f32.mrf.mxu0
        %557 = vmatprep.mubr.f32.mxu0 0.0
        %558 = vmatmul.mubr.f32.gmra.mxu0 %v310
        %v559 = vpop.f32.mrf.mxu0
        %v560 = vadd.f32 0.0, %v559
        %v561 = vpop.f32.mrf.mxu0
        %562 = vmatprep.mubr.f32.mxu0 0.0
        %563 = vmatmul.mubr.f32.gmra.mxu0 %v313
        %v564 = vpop.f32.mrf.mxu0
        %v565 = vadd.f32 0.0, %v564
        %v566 = vpop.f32.mrf.mxu0
        %567 = vmatprep.mubr.f32.mxu0 0.0
        %568 = vmatmul.mubr.f32.gmra.mxu0 %v316
        %v569 = vpop.f32.mrf.mxu0
        %v570 = vadd.f32 0.0, %v569
        %v571 = vpop.f32.mrf.mxu0
        %572 = vmatprep.mubr.f32.mxu0 0.0
        %573 = vmatmul.mubr.f32.gmra.mxu0 %v319
        %v574 = vpop.f32.mrf.mxu0
        %v575 = vadd.f32 0.0, %v574
        %v576 = vpop.f32.mrf.mxu0
        %577 = vmatprep.mubr.f32.mxu0 0.0
        %578 = vmatmul.mubr.f32.gmra.mxu0 %v322
        %v579 = vpop.f32.mrf.mxu0
        %v580 = vadd.f32 0.0, %v579
        %v581 = vpop.f32.mrf.mxu0
        %582 = vmatprep.mubr.f32.mxu0 0.0
        %583 = vmatmul.mubr.f32.gmra.mxu0 %v325
        %v584 = vpop.f32.mrf.mxu0
        %v585 = vadd.f32 0.0, %v584
        %v586 = vpop.f32.mrf.mxu0
        %587 = vmatprep.mubr.f32.mxu0 0.0
        %588 = vmatmul.mubr.f32.gmra.mxu0 %v328
        %v589 = vpop.f32.mrf.mxu0
        %v590 = vadd.f32 0.0, %v589
        %v591 = vpop.f32.mrf.mxu0
        %592 = vmatprep.mubr.f32.mxu0 0.0
        %593 = vmatmul.mubr.f32.gmra.mxu0 %v331
        %v594 = vpop.f32.mrf.mxu0
        %v595 = vadd.f32 0.0, %v594
        %v596 = vpop.f32.mrf.mxu0
        %597 = vmatprep.mubr.f32.mxu0 0.0
        %598 = vmatmul.mubr.f32.gmra.mxu0 %v334
        %v599 = vpop.f32.mrf.mxu0
        %v600 = vadd.f32 0.0, %v599
        %v601 = vpop.f32.mrf.mxu0
        %602 = vmatprep.mubr.f32.mxu0 0.0
        %603 = vmatmul.mubr.f32.gmra.mxu0 %v337
        %v604 = vpop.f32.mrf.mxu0
        %v605 = vadd.f32 0.0, %v604
        %v606 = vpop.f32.mrf.mxu0
        %607 = vmatprep.mubr.f32.mxu0 0.0
        %608 = vmatmul.mubr.f32.gmra.mxu0 %v340
        %v609 = vpop.f32.mrf.mxu0
        %v610 = vadd.f32 0.0, %v609
        %v611 = vpop.f32.mrf.mxu0
        %612 = vmatprep.mubr.f32.mxu0 0.0
        %613 = vmatmul.mubr.f32.gmra.mxu0 %v343
        %v614 = vpop.f32.mrf.mxu0
        %v615 = vadd.f32 0.0, %v614
        %v616 = vpop.f32.mrf.mxu0
        %617 = vmatprep.mubr.f32.mxu0 0.0
        %618 = vmatmul.mubr.f32.gmra.mxu0 %v346
        %v619 = vpop.f32.mrf.mxu0
        %v620 = vadd.f32 0.0, %v619
        %v621 = vpop.f32.mrf.mxu0
        %622 = vmatprep.mubr.f32.mxu0 0.0
        %623 = vmatmul.mubr.f32.gmra.mxu0 %v349
        %v624 = vpop.f32.mrf.mxu0
        %v625 = vadd.f32 0.0, %v624
        %v626 = vpop.f32.mrf.mxu0
        %627 = vmatprep.mubr.f32.mxu0 0.0
        %628 = vmatmul.mubr.f32.gmra.mxu0 %v352
        %v629 = vpop.f32.mrf.mxu0
        %v630 = vadd.f32 0.0, %v629
        %v631 = vpop.f32.mrf.mxu0
        %632 = vmatprep.mubr.f32.mxu0 0.0
        %633 = vmatmul.mubr.f32.gmra.mxu0 %v355
        %v634 = vpop.f32.mrf.mxu0
        %v635 = vadd.f32 0.0, %v634
        %v636 = vpop.f32.mrf.mxu0
        %637 = vmatprep.mubr.f32.mxu0 0.0
        %638 = vmatmul.mubr.f32.gmra.mxu0 %v358
        %v639 = vpop.f32.mrf.mxu0
        %v640 = vadd.f32 0.0, %v639
        %v641 = vpop.f32.mrf.mxu0
        %642 = vmatprep.mubr.f32.mxu0 0.0
        %643 = vmatmul.mubr.f32.gmra.mxu0 %v361
        %v644 = vpop.f32.mrf.mxu0
        %v645 = vadd.f32 0.0, %v644
        %v646 = vpop.f32.mrf.mxu0
        %647 = vmatprep.mubr.f32.mxu0 0.0
        %648 = vmatmul.mubr.f32.gmra.mxu0 %v364
        %v649 = vpop.f32.mrf.mxu0
        %v650 = vadd.f32 0.0, %v649
        %v651 = vpop.f32.mrf.mxu0
        %652 = vmatprep.mubr.f32.mxu0 0.0
        %653 = vmatmul.mubr.f32.gmra.mxu0 %v367
        %v654 = vpop.f32.mrf.mxu0
        %v655 = vadd.f32 0.0, %v654
        %v656 = vpop.f32.mrf.mxu0
        %657 = vmatprep.mubr.f32.mxu0 0.0
        %658 = vmatmul.mubr.f32.gmra.mxu0 %v370
        %v659 = vpop.f32.mrf.mxu0
        %v660 = vadd.f32 0.0, %v659
        %v661 = vpop.f32.mrf.mxu0
        %662 = vmatprep.mubr.f32.mxu0 0.0
        %663 = vmatmul.mubr.f32.gmra.mxu0 %v373
        %v664 = vpop.f32.mrf.mxu0
        %v665 = vadd.f32 0.0, %v664
        %v666 = vpop.f32.mrf.mxu0
        %667 = vmatprep.mubr.f32.mxu0 0.0
        %668 = vmatmul.mubr.f32.gmra.mxu0 %v376
        %v669 = vpop.f32.mrf.mxu0
        %v670 = vadd.f32 0.0, %v669
        %v671 = vpop.f32.mrf.mxu0
        %672 = vmatprep.mubr.f32.mxu0 0.0
        %673 = vmatmul.mubr.f32.gmra.mxu0 %v379
        %v674 = vpop.f32.mrf.mxu0
        %v675 = vadd.f32 0.0, %v674
        %v676 = vpop.f32.mrf.mxu0
        %677 = vmatprep.mubr.f32.mxu0 0.0
        %678 = vmatmul.mubr.f32.gmra.mxu0 %v382
        %v679 = vpop.f32.mrf.mxu0
        %v680 = vadd.f32 0.0, %v679
        %v681 = vpop.f32.mrf.mxu0
        %682 = vmatprep.mubr.f32.mxu0 0.0
        %683 = vmatmul.mubr.f32.gmra.mxu0 %v385
        %v684 = vpop.f32.mrf.mxu0
        %v685 = vadd.f32 0.0, %v684
        %v686 = vpop.f32.mrf.mxu0
        %687 = vmatprep.mubr.f32.mxu0 0.0
        %688 = vmatmul.mubr.f32.gmra.mxu0 %v388
        %v689 = vpop.f32.mrf.mxu0
        %v690 = vadd.f32 0.0, %v689
        %v691 = vpop.f32.mrf.mxu0
        %692 = vmatprep.mubr.f32.mxu0 0.0
        %693 = vmatmul.mubr.f32.gmra.mxu0 %v391
        %v694 = vpop.f32.mrf.mxu0
        %v695 = vadd.f32 0.0, %v694
        %v696 = vpop.f32.mrf.mxu0
        %697 = vdwg.mxu0
        %698 = vxpose.xlu0.b32.start [1/16] %v460, 128
        %699 = vxpose.xlu0.b32.cont [2/16] %v465, 128
        %700 = vxpose.xlu0.b32.cont [3/16] %v470, 128
        %701 = vxpose.xlu0.b32.cont [4/16] %v475, 128
        %702 = vxpose.xlu0.b32.cont [5/16] 0.0, 128
        %703 = vxpose.xlu0.b32.cont [6/16] 0.0, 128
        %704 = vxpose.xlu0.b32.cont [7/16] 0.0, 128
        %705 = vxpose.xlu0.b32.cont [8/16] 0.0, 128
        %706 = vxpose.xlu0.b32.cont [9/16] 0.0, 128
        %707 = vxpose.xlu0.b32.cont [10/16] 0.0, 128
        %708 = vxpose.xlu0.b32.cont [11/16] 0.0, 128
        %709 = vxpose.xlu0.b32.cont [12/16] 0.0, 128
        %710 = vxpose.xlu0.b32.cont [13/16] 0.0, 128
        %711 = vxpose.xlu0.b32.cont [14/16] 0.0, 128
        %712 = vxpose.xlu0.b32.cont [15/16] 0.0, 128
        %713 = vxpose.xlu0.b32.end [16/16] 0.0, 128
        %v714 = vpop.trf.xlu0
        %v715 = vpop.trf.xlu0
        %v716 = vpop.trf.xlu0
        %v717 = vpop.trf.xlu0
        %v718 = vpop.trf.xlu0
        %v719 = vpop.trf.xlu0
        %v720 = vpop.trf.xlu0
        %v721 = vpop.trf.xlu0
        %v722 = vpop.trf.xlu0
        %v723 = vpop.trf.xlu0
        %v724 = vpop.trf.xlu0
        %v725 = vpop.trf.xlu0
        %v726 = vpop.trf.xlu0
        %v727 = vpop.trf.xlu0
        %v728 = vpop.trf.xlu0
        %v729 = vpop.trf.xlu0
        %v731 = vsel %vm248, %v714, 0
        %v734 = vsel %vm248, %v715, 0
        %v737 = vsel %vm248, %v716, 0
        %v740 = vsel %vm248, %v717, 0
        %v743 = vsel %vm248, %v718, 0
        %v746 = vsel %vm248, %v719, 0
        %v749 = vsel %vm248, %v720, 0
        %v752 = vsel %vm248, %v721, 0
        %v755 = vsel %vm248, %v722, 0
        %v758 = vsel %vm248, %v723, 0
        %v761 = vsel %vm248, %v724, 0
        %v764 = vsel %vm248, %v725, 0
        %v767 = vsel %vm248, %v726, 0
        %v770 = vsel %vm248, %v727, 0
        %v773 = vsel %vm248, %v728, 0
        %v776 = vsel %vm248, %v729, 0
        %778 = vmatprep.subr.mxu0 0.0
        %779 = vmatpush1.msra.mxu0 0.0
        %780 = vmatprep.subr.mxu0 0.0
        %781 = vmatpush1.msra.mxu0 0.0
        %782 = vmatprep.subr.mxu0 0.0
        %783 = vmatpush1.msra.mxu0 0.0
        %784 = vmatprep.subr.mxu0 0.0
        %785 = vmatpush1.msra.mxu0 0.0
        %786 = vmatprep.subr.mxu0 0.0
        %787 = vmatpush1.msra.mxu0 0.0
        %788 = vmatprep.subr.mxu0 0.0
        %789 = vmatpush1.msra.mxu0 0.0
        %790 = vmatprep.subr.mxu0 0.0
        %791 = vmatpush1.msra.mxu0 0.0
        %792 = vmatprep.subr.mxu0 0.0
        %793 = vmatpush1.msra.mxu0 0.0
        %794 = vmatprep.subr.mxu0 0.0
        %795 = vmatpush1.msra.mxu0 0.0
        %796 = vmatprep.subr.mxu0 0.0
        %797 = vmatpush1.msra.mxu0 0.0
        %798 = vmatprep.subr.mxu0 0.0
        %799 = vmatpush1.msra.mxu0 0.0
        %800 = vmatprep.subr.mxu0 0.0
        %801 = vmatpush1.msra.mxu0 0.0
        %802 = vmatprep.subr.mxu0 0.0
        %803 = vmatpush1.msra.mxu0 %v555
        %804 = vmatprep.subr.mxu0 0.0
        %805 = vmatpush1.msra.mxu0 %v550
        %806 = vmatprep.subr.mxu0 0.0
        %807 = vmatpush1.msra.mxu0 %v545
        %808 = vmatprep.subr.mxu0 0.0
        %809 = vmatpush1.msra.mxu0 %v540
        %810 = vmatprep.subr.mxu0 0.0
        %811 = vmatpush2.msra.mxu0 0.0
        %812 = vmatprep.subr.mxu0 0.0
        %813 = vmatpush2.msra.mxu0 0.0
        %814 = vmatprep.subr.mxu0 0.0
        %815 = vmatpush2.msra.mxu0 0.0
        %816 = vmatprep.subr.mxu0 0.0
        %817 = vmatpush2.msra.mxu0 0.0
        %818 = vmatprep.subr.mxu0 0.0
        %819 = vmatpush2.msra.mxu0 0.0
        %820 = vmatprep.subr.mxu0 0.0
        %821 = vmatpush2.msra.mxu0 0.0
        %822 = vmatprep.subr.mxu0 0.0
        %823 = vmatpush2.msra.mxu0 0.0
        %824 = vmatprep.subr.mxu0 0.0
        %825 = vmatpush2.msra.mxu0 0.0
        %826 = vmatprep.subr.mxu0 0.0
        %827 = vmatpush2.msra.mxu0 0.0
        %828 = vmatprep.subr.mxu0 0.0
        %829 = vmatpush2.msra.mxu0 0.0
        %830 = vmatprep.subr.mxu0 0.0
        %831 = vmatpush2.msra.mxu0 0.0
        %832 = vmatprep.subr.mxu0 0.0
        %833 = vmatpush2.msra.mxu0 0.0
        %834 = vmatprep.subr.mxu0 0.0
        %835 = vmatpush2.msra.mxu0 0.0
        %836 = vmatprep.subr.mxu0 0.0
        %837 = vmatpush2.msra.mxu0 0.0
        %838 = vmatprep.subr.mxu0 0.0
        %839 = vmatpush2.msra.mxu0 0.0
        %840 = vmatprep.subr.mxu0 0.0
        %841 = vmatpush2.msra.mxu0 0.0
        %842 = vmatprep.mubr.f32.mxu0 0.0
        %843 = vmatmul.mubr.f32.gmra.mxu0 %v731
        %v844 = vpop.f32.mrf.mxu0
        %v845 = vadd.f32 0.0, %v844
        %v846 = vpop.f32.mrf.mxu0
        %847 = vmatprep.mubr.f32.mxu0 0.0
        %848 = vmatmul.mubr.f32.gmra.mxu0 %v734
        %v849 = vpop.f32.mrf.mxu0
        %v850 = vadd.f32 0.0, %v849
        %v851 = vpop.f32.mrf.mxu0
        %852 = vmatprep.mubr.f32.mxu0 0.0
        %853 = vmatmul.mubr.f32.gmra.mxu0 %v737
        %v854 = vpop.f32.mrf.mxu0
        %v855 = vadd.f32 0.0, %v854
        %v856 = vpop.f32.mrf.mxu0
        %857 = vmatprep.mubr.f32.mxu0 0.0
        %858 = vmatmul.mubr.f32.gmra.mxu0 %v740
        %v859 = vpop.f32.mrf.mxu0
        %v860 = vadd.f32 0.0, %v859
        %v861 = vpop.f32.mrf.mxu0
        %862 = vmatprep.mubr.f32.mxu0 0.0
        %863 = vmatmul.mubr.f32.gmra.mxu0 %v743
        %v864 = vpop.f32.mrf.mxu0
        %v865 = vadd.f32 0.0, %v864
        %v866 = vpop.f32.mrf.mxu0
        %867 = vmatprep.mubr.f32.mxu0 0.0
        %868 = vmatmul.mubr.f32.gmra.mxu0 %v746
        %v869 = vpop.f32.mrf.mxu0
        %v870 = vadd.f32 0.0, %v869
        %v871 = vpop.f32.mrf.mxu0
        %872 = vmatprep.mubr.f32.mxu0 0.0
        %873 = vmatmul.mubr.f32.gmra.mxu0 %v749
        %v874 = vpop.f32.mrf.mxu0
        %v875 = vadd.f32 0.0, %v874
        %v876 = vpop.f32.mrf.mxu0
        %877 = vmatprep.mubr.f32.mxu0 0.0
        %878 = vmatmul.mubr.f32.gmra.mxu0 %v752
        %v879 = vpop.f32.mrf.mxu0
        %v880 = vadd.f32 0.0, %v879
        %v881 = vpop.f32.mrf.mxu0
        %882 = vmatprep.mubr.f32.mxu0 0.0
        %883 = vmatmul.mubr.f32.gmra.mxu0 %v755
        %v884 = vpop.f32.mrf.mxu0
        %v885 = vadd.f32 0.0, %v884
        %v886 = vpop.f32.mrf.mxu0
        %887 = vmatprep.mubr.f32.mxu0 0.0
        %888 = vmatmul.mubr.f32.gmra.mxu0 %v758
        %v889 = vpop.f32.mrf.mxu0
        %v890 = vadd.f32 0.0, %v889
        %v891 = vpop.f32.mrf.mxu0
        %892 = vmatprep.mubr.f32.mxu0 0.0
        %893 = vmatmul.mubr.f32.gmra.mxu0 %v761
        %v894 = vpop.f32.mrf.mxu0
        %v895 = vadd.f32 0.0, %v894
        %v896 = vpop.f32.mrf.mxu0
        %897 = vmatprep.mubr.f32.mxu0 0.0
        %898 = vmatmul.mubr.f32.gmra.mxu0 %v764
        %v899 = vpop.f32.mrf.mxu0
        %v900 = vadd.f32 0.0, %v899
        %v901 = vpop.f32.mrf.mxu0
        %902 = vmatprep.mubr.f32.mxu0 0.0
        %903 = vmatmul.mubr.f32.gmra.mxu0 %v767
        %v904 = vpop.f32.mrf.mxu0
        %v905 = vadd.f32 0.0, %v904
        %v906 = vpop.f32.mrf.mxu0
        %907 = vmatprep.mubr.f32.mxu0 0.0
        %908 = vmatmul.mubr.f32.gmra.mxu0 %v770
        %v909 = vpop.f32.mrf.mxu0
        %v910 = vadd.f32 0.0, %v909
        %v911 = vpop.f32.mrf.mxu0
        %912 = vmatprep.mubr.f32.mxu0 0.0
        %913 = vmatmul.mubr.f32.gmra.mxu0 %v773
        %v914 = vpop.f32.mrf.mxu0
        %v915 = vadd.f32 0.0, %v914
        %v916 = vpop.f32.mrf.mxu0
        %917 = vmatprep.mubr.f32.mxu0 0.0
        %918 = vmatmul.mubr.f32.gmra.mxu0 %v776
        %v919 = vpop.f32.mrf.mxu0
        %v920 = vadd.f32 0.0, %v919
        %v921 = vpop.f32.mrf.mxu0
        %922 = vdwg.mxu0
        %923 = vxpose.xlu0.b32.start [1/16] %v480, 128
        %924 = vxpose.xlu0.b32.cont [2/16] %v485, 128
        %925 = vxpose.xlu0.b32.cont [3/16] %v490, 128
        %926 = vxpose.xlu0.b32.cont [4/16] %v495, 128
        %927 = vxpose.xlu0.b32.cont [5/16] 0.0, 128
        %928 = vxpose.xlu0.b32.cont [6/16] 0.0, 128
        %929 = vxpose.xlu0.b32.cont [7/16] 0.0, 128
        %930 = vxpose.xlu0.b32.cont [8/16] 0.0, 128
        %931 = vxpose.xlu0.b32.cont [9/16] 0.0, 128
        %932 = vxpose.xlu0.b32.cont [10/16] 0.0, 128
        %933 = vxpose.xlu0.b32.cont [11/16] 0.0, 128
        %934 = vxpose.xlu0.b32.cont [12/16] 0.0, 128
        %935 = vxpose.xlu0.b32.cont [13/16] 0.0, 128
        %936 = vxpose.xlu0.b32.cont [14/16] 0.0, 128
        %937 = vxpose.xlu0.b32.cont [15/16] 0.0, 128
        %938 = vxpose.xlu0.b32.end [16/16] 0.0, 128
        %v939 = vpop.trf.xlu0
        %v940 = vpop.trf.xlu0
        %v941 = vpop.trf.xlu0
        %v942 = vpop.trf.xlu0
        %v943 = vpop.trf.xlu0
        %v944 = vpop.trf.xlu0
        %v945 = vpop.trf.xlu0
        %v946 = vpop.trf.xlu0
        %v947 = vpop.trf.xlu0
        %v948 = vpop.trf.xlu0
        %v949 = vpop.trf.xlu0
        %v950 = vpop.trf.xlu0
        %v951 = vpop.trf.xlu0
        %v952 = vpop.trf.xlu0
        %v953 = vpop.trf.xlu0
        %v954 = vpop.trf.xlu0
        %v956 = vsel %vm248, %v939, 0
        %v959 = vsel %vm248, %v940, 0
        %v962 = vsel %vm248, %v941, 0
        %v965 = vsel %vm248, %v942, 0
        %v968 = vsel %vm248, %v943, 0
        %v971 = vsel %vm248, %v944, 0
        %v974 = vsel %vm248, %v945, 0
        %v977 = vsel %vm248, %v946, 0
        %v980 = vsel %vm248, %v947, 0
        %v983 = vsel %vm248, %v948, 0
        %v986 = vsel %vm248, %v949, 0
        %v989 = vsel %vm248, %v950, 0
        %v992 = vsel %vm248, %v951, 0
        %v995 = vsel %vm248, %v952, 0
        %v998 = vsel %vm248, %v953, 0
        %v1001 = vsel %vm248, %v954, 0
        %1003 = vmatprep.subr.mxu0 0.0
        %1004 = vmatpush1.msra.mxu0 0.0
        %1005 = vmatprep.subr.mxu0 0.0
        %1006 = vmatpush1.msra.mxu0 0.0
        %1007 = vmatprep.subr.mxu0 0.0
        %1008 = vmatpush1.msra.mxu0 0.0
        %1009 = vmatprep.subr.mxu0 0.0
        %1010 = vmatpush1.msra.mxu0 0.0
        %1011 = vmatprep.subr.mxu0 0.0
        %1012 = vmatpush1.msra.mxu0 0.0
        %1013 = vmatprep.subr.mxu0 0.0
        %1014 = vmatpush1.msra.mxu0 0.0
        %1015 = vmatprep.subr.mxu0 0.0
        %1016 = vmatpush1.msra.mxu0 0.0
        %1017 = vmatprep.subr.mxu0 0.0
        %1018 = vmatpush1.msra.mxu0 0.0
        %1019 = vmatprep.subr.mxu0 0.0
        %1020 = vmatpush1.msra.mxu0 0.0
        %1021 = vmatprep.subr.mxu0 0.0
        %1022 = vmatpush1.msra.mxu0 0.0
        %1023 = vmatprep.subr.mxu0 0.0
        %1024 = vmatpush1.msra.mxu0 0.0
        %1025 = vmatprep.subr.mxu0 0.0
        %1026 = vmatpush1.msra.mxu0 0.0
        %1027 = vmatprep.subr.mxu0 0.0
        %1028 = vmatpush1.msra.mxu0 %v575
        %1029 = vmatprep.subr.mxu0 0.0
        %1030 = vmatpush1.msra.mxu0 %v570
        %1031 = vmatprep.subr.mxu0 0.0
        %1032 = vmatpush1.msra.mxu0 %v565
        %1033 = vmatprep.subr.mxu0 0.0
        %1034 = vmatpush1.msra.mxu0 %v560
        %1035 = vmatprep.subr.mxu0 0.0
        %1036 = vmatpush2.msra.mxu0 0.0
        %1037 = vmatprep.subr.mxu0 0.0
        %1038 = vmatpush2.msra.mxu0 0.0
        %1039 = vmatprep.subr.mxu0 0.0
        %1040 = vmatpush2.msra.mxu0 0.0
        %1041 = vmatprep.subr.mxu0 0.0
        %1042 = vmatpush2.msra.mxu0 0.0
        %1043 = vmatprep.subr.mxu0 0.0
        %1044 = vmatpush2.msra.mxu0 0.0
        %1045 = vmatprep.subr.mxu0 0.0
        %1046 = vmatpush2.msra.mxu0 0.0
        %1047 = vmatprep.subr.mxu0 0.0
        %1048 = vmatpush2.msra.mxu0 0.0
        %1049 = vmatprep.subr.mxu0 0.0
        %1050 = vmatpush2.msra.mxu0 0.0
        %1051 = vmatprep.subr.mxu0 0.0
        %1052 = vmatpush2.msra.mxu0 0.0
        %1053 = vmatprep.subr.mxu0 0.0
        %1054 = vmatpush2.msra.mxu0 0.0
        %1055 = vmatprep.subr.mxu0 0.0
        %1056 = vmatpush2.msra.mxu0 0.0
        %1057 = vmatprep.subr.mxu0 0.0
        %1058 = vmatpush2.msra.mxu0 0.0
        %1059 = vmatprep.subr.mxu0 0.0
        %1060 = vmatpush2.msra.mxu0 0.0
        %1061 = vmatprep.subr.mxu0 0.0
        %1062 = vmatpush2.msra.mxu0 0.0
        %1063 = vmatprep.subr.mxu0 0.0
        %1064 = vmatpush2.msra.mxu0 0.0
        %1065 = vmatprep.subr.mxu0 0.0
        %1066 = vmatpush2.msra.mxu0 0.0
        %1067 = vmatprep.mubr.f32.mxu0 0.0
        %1068 = vmatmul.mubr.f32.gmra.mxu0 %v956
        %v1069 = vpop.f32.mrf.mxu0
        %v1070 = vadd.f32 0.0, %v1069
        %v1071 = vpop.f32.mrf.mxu0
        %1072 = vmatprep.mubr.f32.mxu0 0.0
        %1073 = vmatmul.mubr.f32.gmra.mxu0 %v959
        %v1074 = vpop.f32.mrf.mxu0
        %v1075 = vadd.f32 0.0, %v1074
        %v1076 = vpop.f32.mrf.mxu0
        %1077 = vmatprep.mubr.f32.mxu0 0.0
        %1078 = vmatmul.mubr.f32.gmra.mxu0 %v962
        %v1079 = vpop.f32.mrf.mxu0
        %v1080 = vadd.f32 0.0, %v1079
        %v1081 = vpop.f32.mrf.mxu0
        %1082 = vmatprep.mubr.f32.mxu0 0.0
        %1083 = vmatmul.mubr.f32.gmra.mxu0 %v965
        %v1084 = vpop.f32.mrf.mxu0
        %v1085 = vadd.f32 0.0, %v1084
        %v1086 = vpop.f32.mrf.mxu0
        %1087 = vmatprep.mubr.f32.mxu0 0.0
        %1088 = vmatmul.mubr.f32.gmra.mxu0 %v968
        %v1089 = vpop.f32.mrf.mxu0
        %v1090 = vadd.f32 0.0, %v1089
        %v1091 = vpop.f32.mrf.mxu0
        %1092 = vmatprep.mubr.f32.mxu0 0.0
        %1093 = vmatmul.mubr.f32.gmra.mxu0 %v971
        %v1094 = vpop.f32.mrf.mxu0
        %v1095 = vadd.f32 0.0, %v1094
        %v1096 = vpop.f32.mrf.mxu0
        %1097 = vmatprep.mubr.f32.mxu0 0.0
        %1098 = vmatmul.mubr.f32.gmra.mxu0 %v974
        %v1099 = vpop.f32.mrf.mxu0
        %v1100 = vadd.f32 0.0, %v1099
        %v1101 = vpop.f32.mrf.mxu0
        %1102 = vmatprep.mubr.f32.mxu0 0.0
        %1103 = vmatmul.mubr.f32.gmra.mxu0 %v977
        %v1104 = vpop.f32.mrf.mxu0
        %v1105 = vadd.f32 0.0, %v1104
        %v1106 = vpop.f32.mrf.mxu0
        %1107 = vmatprep.mubr.f32.mxu0 0.0
        %1108 = vmatmul.mubr.f32.gmra.mxu0 %v980
        %v1109 = vpop.f32.mrf.mxu0
        %v1110 = vadd.f32 0.0, %v1109
        %v1111 = vpop.f32.mrf.mxu0
        %1112 = vmatprep.mubr.f32.mxu0 0.0
        %1113 = vmatmul.mubr.f32.gmra.mxu0 %v983
        %v1114 = vpop.f32.mrf.mxu0
        %v1115 = vadd.f32 0.0, %v1114
        %v1116 = vpop.f32.mrf.mxu0
        %1117 = vmatprep.mubr.f32.mxu0 0.0
        %1118 = vmatmul.mubr.f32.gmra.mxu0 %v986
        %v1119 = vpop.f32.mrf.mxu0
        %v1120 = vadd.f32 0.0, %v1119
        %v1121 = vpop.f32.mrf.mxu0
        %1122 = vmatprep.mubr.f32.mxu0 0.0
        %1123 = vmatmul.mubr.f32.gmra.mxu0 %v989
        %v1124 = vpop.f32.mrf.mxu0
        %v1125 = vadd.f32 0.0, %v1124
        %v1126 = vpop.f32.mrf.mxu0
        %1127 = vmatprep.mubr.f32.mxu0 0.0
        %1128 = vmatmul.mubr.f32.gmra.mxu0 %v992
        %v1129 = vpop.f32.mrf.mxu0
        %v1130 = vadd.f32 0.0, %v1129
        %v1131 = vpop.f32.mrf.mxu0
        %1132 = vmatprep.mubr.f32.mxu0 0.0
        %1133 = vmatmul.mubr.f32.gmra.mxu0 %v995
        %v1134 = vpop.f32.mrf.mxu0
        %v1135 = vadd.f32 0.0, %v1134
        %v1136 = vpop.f32.mrf.mxu0
        %1137 = vmatprep.mubr.f32.mxu0 0.0
        %1138 = vmatmul.mubr.f32.gmra.mxu0 %v998
        %v1139 = vpop.f32.mrf.mxu0
        %v1140 = vadd.f32 0.0, %v1139
        %v1141 = vpop.f32.mrf.mxu0
        %1142 = vmatprep.mubr.f32.mxu0 0.0
        %1143 = vmatmul.mubr.f32.gmra.mxu0 %v1001
        %v1144 = vpop.f32.mrf.mxu0
        %v1145 = vadd.f32 0.0, %v1144
        %v1146 = vpop.f32.mrf.mxu0
        %1147 = vdwg.mxu0
        %1148 = vxpose.xlu0.b32.start [1/16] %v500, 128
        %1149 = vxpose.xlu0.b32.cont [2/16] %v505, 128
        %1150 = vxpose.xlu0.b32.cont [3/16] %v510, 128
        %1151 = vxpose.xlu0.b32.cont [4/16] %v515, 128
        %1152 = vxpose.xlu0.b32.cont [5/16] 0.0, 128
        %1153 = vxpose.xlu0.b32.cont [6/16] 0.0, 128
        %1154 = vxpose.xlu0.b32.cont [7/16] 0.0, 128
        %1155 = vxpose.xlu0.b32.cont [8/16] 0.0, 128
        %1156 = vxpose.xlu0.b32.cont [9/16] 0.0, 128
        %1157 = vxpose.xlu0.b32.cont [10/16] 0.0, 128
        %1158 = vxpose.xlu0.b32.cont [11/16] 0.0, 128
        %1159 = vxpose.xlu0.b32.cont [12/16] 0.0, 128
        %1160 = vxpose.xlu0.b32.cont [13/16] 0.0, 128
        %1161 = vxpose.xlu0.b32.cont [14/16] 0.0, 128
        %1162 = vxpose.xlu0.b32.cont [15/16] 0.0, 128
        %1163 = vxpose.xlu0.b32.end [16/16] 0.0, 128
        %v1164 = vpop.trf.xlu0
        %v1165 = vpop.trf.xlu0
        %v1166 = vpop.trf.xlu0
        %v1167 = vpop.trf.xlu0
        %v1168 = vpop.trf.xlu0
        %v1169 = vpop.trf.xlu0
        %v1170 = vpop.trf.xlu0
        %v1171 = vpop.trf.xlu0
        %v1172 = vpop.trf.xlu0
        %v1173 = vpop.trf.xlu0
        %v1174 = vpop.trf.xlu0
        %v1175 = vpop.trf.xlu0
        %v1176 = vpop.trf.xlu0
        %v1177 = vpop.trf.xlu0
        %v1178 = vpop.trf.xlu0
        %v1179 = vpop.trf.xlu0
        %v1181 = vsel %vm248, %v1164, 0
        %v1184 = vsel %vm248, %v1165, 0
        %v1187 = vsel %vm248, %v1166, 0
        %v1190 = vsel %vm248, %v1167, 0
        %v1193 = vsel %vm248, %v1168, 0
        %v1196 = vsel %vm248, %v1169, 0
        %v1199 = vsel %vm248, %v1170, 0
        %v1202 = vsel %vm248, %v1171, 0
        %v1205 = vsel %vm248, %v1172, 0
        %v1208 = vsel %vm248, %v1173, 0
        %v1211 = vsel %vm248, %v1174, 0
        %v1214 = vsel %vm248, %v1175, 0
        %v1217 = vsel %vm248, %v1176, 0
        %v1220 = vsel %vm248, %v1177, 0
        %v1223 = vsel %vm248, %v1178, 0
        %v1226 = vsel %vm248, %v1179, 0
        %1228 = vmatprep.subr.mxu0 0.0
        %1229 = vmatpush1.msra.mxu0 0.0
        %1230 = vmatprep.subr.mxu0 0.0
        %1231 = vmatpush1.msra.mxu0 0.0
        %1232 = vmatprep.subr.mxu0 0.0
        %1233 = vmatpush1.msra.mxu0 0.0
        %1234 = vmatprep.subr.mxu0 0.0
        %1235 = vmatpush1.msra.mxu0 0.0
        %1236 = vmatprep.subr.mxu0 0.0
        %1237 = vmatpush1.msra.mxu0 0.0
        %1238 = vmatprep.subr.mxu0 0.0
        %1239 = vmatpush1.msra.mxu0 0.0
        %1240 = vmatprep.subr.mxu0 0.0
        %1241 = vmatpush1.msra.mxu0 0.0
        %1242 = vmatprep.subr.mxu0 0.0
        %1243 = vmatpush1.msra.mxu0 0.0
        %1244 = vmatprep.subr.mxu0 0.0
        %1245 = vmatpush1.msra.mxu0 0.0
        %1246 = vmatprep.subr.mxu0 0.0
        %1247 = vmatpush1.msra.mxu0 0.0
        %1248 = vmatprep.subr.mxu0 0.0
        %1249 = vmatpush1.msra.mxu0 0.0
        %1250 = vmatprep.subr.mxu0 0.0
        %1251 = vmatpush1.msra.mxu0 0.0
        %1252 = vmatprep.subr.mxu0 0.0
        %1253 = vmatpush1.msra.mxu0 %v595
        %1254 = vmatprep.subr.mxu0 0.0
        %1255 = vmatpush1.msra.mxu0 %v590
        %1256 = vmatprep.subr.mxu0 0.0
        %1257 = vmatpush1.msra.mxu0 %v585
        %1258 = vmatprep.subr.mxu0 0.0
        %1259 = vmatpush1.msra.mxu0 %v580
        %1260 = vmatprep.subr.mxu0 0.0
        %1261 = vmatpush2.msra.mxu0 0.0
        %1262 = vmatprep.subr.mxu0 0.0
        %1263 = vmatpush2.msra.mxu0 0.0
        %1264 = vmatprep.subr.mxu0 0.0
        %1265 = vmatpush2.msra.mxu0 0.0
        %1266 = vmatprep.subr.mxu0 0.0
        %1267 = vmatpush2.msra.mxu0 0.0
        %1268 = vmatprep.subr.mxu0 0.0
        %1269 = vmatpush2.msra.mxu0 0.0
        %1270 = vmatprep.subr.mxu0 0.0
        %1271 = vmatpush2.msra.mxu0 0.0
        %1272 = vmatprep.subr.mxu0 0.0
        %1273 = vmatpush2.msra.mxu0 0.0
        %1274 = vmatprep.subr.mxu0 0.0
        %1275 = vmatpush2.msra.mxu0 0.0
        %1276 = vmatprep.subr.mxu0 0.0
        %1277 = vmatpush2.msra.mxu0 0.0
        %1278 = vmatprep.subr.mxu0 0.0
        %1279 = vmatpush2.msra.mxu0 0.0
        %1280 = vmatprep.subr.mxu0 0.0
        %1281 = vmatpush2.msra.mxu0 0.0
        %1282 = vmatprep.subr.mxu0 0.0
        %1283 = vmatpush2.msra.mxu0 0.0
        %1284 = vmatprep.subr.mxu0 0.0
        %1285 = vmatpush2.msra.mxu0 0.0
        %1286 = vmatprep.subr.mxu0 0.0
        %1287 = vmatpush2.msra.mxu0 0.0
        %1288 = vmatprep.subr.mxu0 0.0
        %1289 = vmatpush2.msra.mxu0 0.0
        %1290 = vmatprep.subr.mxu0 0.0
        %1291 = vmatpush2.msra.mxu0 0.0
        %1292 = vmatprep.mubr.f32.mxu0 0.0
        %1293 = vmatmul.mubr.f32.gmra.mxu0 %v1181
        %v1294 = vpop.f32.mrf.mxu0
        %v1295 = vadd.f32 0.0, %v1294
        %v1296 = vpop.f32.mrf.mxu0
        %1297 = vmatprep.mubr.f32.mxu0 0.0
        %1298 = vmatmul.mubr.f32.gmra.mxu0 %v1184
        %v1299 = vpop.f32.mrf.mxu0
        %v1300 = vadd.f32 0.0, %v1299
        %v1301 = vpop.f32.mrf.mxu0
        %1302 = vmatprep.mubr.f32.mxu0 0.0
        %1303 = vmatmul.mubr.f32.gmra.mxu0 %v1187
        %v1304 = vpop.f32.mrf.mxu0
        %v1305 = vadd.f32 0.0, %v1304
        %v1306 = vpop.f32.mrf.mxu0
        %1307 = vmatprep.mubr.f32.mxu0 0.0
        %1308 = vmatmul.mubr.f32.gmra.mxu0 %v1190
        %v1309 = vpop.f32.mrf.mxu0
        %v1310 = vadd.f32 0.0, %v1309
        %v1311 = vpop.f32.mrf.mxu0
        %1312 = vmatprep.mubr.f32.mxu0 0.0
        %1313 = vmatmul.mubr.f32.gmra.mxu0 %v1193
        %v1314 = vpop.f32.mrf.mxu0
        %v1315 = vadd.f32 0.0, %v1314
        %v1316 = vpop.f32.mrf.mxu0
        %1317 = vmatprep.mubr.f32.mxu0 0.0
        %1318 = vmatmul.mubr.f32.gmra.mxu0 %v1196
        %v1319 = vpop.f32.mrf.mxu0
        %v1320 = vadd.f32 0.0, %v1319
        %v1321 = vpop.f32.mrf.mxu0
        %1322 = vmatprep.mubr.f32.mxu0 0.0
        %1323 = vmatmul.mubr.f32.gmra.mxu0 %v1199
        %v1324 = vpop.f32.mrf.mxu0
        %v1325 = vadd.f32 0.0, %v1324
        %v1326 = vpop.f32.mrf.mxu0
        %1327 = vmatprep.mubr.f32.mxu0 0.0
        %1328 = vmatmul.mubr.f32.gmra.mxu0 %v1202
        %v1329 = vpop.f32.mrf.mxu0
        %v1330 = vadd.f32 0.0, %v1329
        %v1331 = vpop.f32.mrf.mxu0
        %1332 = vmatprep.mubr.f32.mxu0 0.0
        %1333 = vmatmul.mubr.f32.gmra.mxu0 %v1205
        %v1334 = vpop.f32.mrf.mxu0
        %v1335 = vadd.f32 0.0, %v1334
        %v1336 = vpop.f32.mrf.mxu0
        %1337 = vmatprep.mubr.f32.mxu0 0.0
        %1338 = vmatmul.mubr.f32.gmra.mxu0 %v1208
        %v1339 = vpop.f32.mrf.mxu0
        %v1340 = vadd.f32 0.0, %v1339
        %v1341 = vpop.f32.mrf.mxu0
        %1342 = vmatprep.mubr.f32.mxu0 0.0
        %1343 = vmatmul.mubr.f32.gmra.mxu0 %v1211
        %v1344 = vpop.f32.mrf.mxu0
        %v1345 = vadd.f32 0.0, %v1344
        %v1346 = vpop.f32.mrf.mxu0
        %1347 = vmatprep.mubr.f32.mxu0 0.0
        %1348 = vmatmul.mubr.f32.gmra.mxu0 %v1214
        %v1349 = vpop.f32.mrf.mxu0
        %v1350 = vadd.f32 0.0, %v1349
        %v1351 = vpop.f32.mrf.mxu0
        %1352 = vmatprep.mubr.f32.mxu0 0.0
        %1353 = vmatmul.mubr.f32.gmra.mxu0 %v1217
        %v1354 = vpop.f32.mrf.mxu0
        %v1355 = vadd.f32 0.0, %v1354
        %v1356 = vpop.f32.mrf.mxu0
        %1357 = vmatprep.mubr.f32.mxu0 0.0
        %1358 = vmatmul.mubr.f32.gmra.mxu0 %v1220
        %v1359 = vpop.f32.mrf.mxu0
        %v1360 = vadd.f32 0.0, %v1359
        %v1361 = vpop.f32.mrf.mxu0
        %1362 = vmatprep.mubr.f32.mxu0 0.0
        %1363 = vmatmul.mubr.f32.gmra.mxu0 %v1223
        %v1364 = vpop.f32.mrf.mxu0
        %v1365 = vadd.f32 0.0, %v1364
        %v1366 = vpop.f32.mrf.mxu0
        %1367 = vmatprep.mubr.f32.mxu0 0.0
        %1368 = vmatmul.mubr.f32.gmra.mxu0 %v1226
        %v1369 = vpop.f32.mrf.mxu0
        %v1370 = vadd.f32 0.0, %v1369
        %v1371 = vpop.f32.mrf.mxu0
        %1372 = vdwg.mxu0
        %1373 = vxpose.xlu0.b32.start [1/16] %v520, 128
        %1374 = vxpose.xlu0.b32.cont [2/16] %v525, 128
        %1375 = vxpose.xlu0.b32.cont [3/16] %v530, 128
        %1376 = vxpose.xlu0.b32.cont [4/16] %v535, 128
        %1377 = vxpose.xlu0.b32.cont [5/16] 0.0, 128
        %1378 = vxpose.xlu0.b32.cont [6/16] 0.0, 128
        %1379 = vxpose.xlu0.b32.cont [7/16] 0.0, 128
        %1380 = vxpose.xlu0.b32.cont [8/16] 0.0, 128
        %1381 = vxpose.xlu0.b32.cont [9/16] 0.0, 128
        %1382 = vxpose.xlu0.b32.cont [10/16] 0.0, 128
        %1383 = vxpose.xlu0.b32.cont [11/16] 0.0, 128
        %1384 = vxpose.xlu0.b32.cont [12/16] 0.0, 128
        %1385 = vxpose.xlu0.b32.cont [13/16] 0.0, 128
        %1386 = vxpose.xlu0.b32.cont [14/16] 0.0, 128
        %1387 = vxpose.xlu0.b32.cont [15/16] 0.0, 128
        %1388 = vxpose.xlu0.b32.end [16/16] 0.0, 128
        %v1389 = vpop.trf.xlu0
        %v1390 = vpop.trf.xlu0
        %v1391 = vpop.trf.xlu0
        %v1392 = vpop.trf.xlu0
        %v1393 = vpop.trf.xlu0
        %v1394 = vpop.trf.xlu0
        %v1395 = vpop.trf.xlu0
        %v1396 = vpop.trf.xlu0
        %v1397 = vpop.trf.xlu0
        %v1398 = vpop.trf.xlu0
        %v1399 = vpop.trf.xlu0
        %v1400 = vpop.trf.xlu0
        %v1401 = vpop.trf.xlu0
        %v1402 = vpop.trf.xlu0
        %v1403 = vpop.trf.xlu0
        %v1404 = vpop.trf.xlu0
        %v1406 = vsel %vm248, %v1389, 0
        %v1409 = vsel %vm248, %v1390, 0
        %v1412 = vsel %vm248, %v1391, 0
        %v1415 = vsel %vm248, %v1392, 0
        %v1418 = vsel %vm248, %v1393, 0
        %v1421 = vsel %vm248, %v1394, 0
        %v1424 = vsel %vm248, %v1395, 0
        %v1427 = vsel %vm248, %v1396, 0
        %v1430 = vsel %vm248, %v1397, 0
        %v1433 = vsel %vm248, %v1398, 0
        %v1436 = vsel %vm248, %v1399, 0
        %v1439 = vsel %vm248, %v1400, 0
        %v1442 = vsel %vm248, %v1401, 0
        %v1445 = vsel %vm248, %v1402, 0
        %v1448 = vsel %vm248, %v1403, 0
        %v1451 = vsel %vm248, %v1404, 0
        %1453 = vmatprep.subr.mxu0 0.0
        %1454 = vmatpush1.msra.mxu0 0.0
        %1455 = vmatprep.subr.mxu0 0.0
        %1456 = vmatpush1.msra.mxu0 0.0
        %1457 = vmatprep.subr.mxu0 0.0
        %1458 = vmatpush1.msra.mxu0 0.0
        %1459 = vmatprep.subr.mxu0 0.0
        %1460 = vmatpush1.msra.mxu0 0.0
        %1461 = vmatprep.subr.mxu0 0.0
        %1462 = vmatpush1.msra.mxu0 0.0
        %1463 = vmatprep.subr.mxu0 0.0
        %1464 = vmatpush1.msra.mxu0 0.0
        %1465 = vmatprep.subr.mxu0 0.0
        %1466 = vmatpush1.msra.mxu0 0.0
        %1467 = vmatprep.subr.mxu0 0.0
        %1468 = vmatpush1.msra.mxu0 0.0
        %1469 = vmatprep.subr.mxu0 0.0
        %1470 = vmatpush1.msra.mxu0 0.0
        %1471 = vmatprep.subr.mxu0 0.0
        %1472 = vmatpush1.msra.mxu0 0.0
        %1473 = vmatprep.subr.mxu0 0.0
        %1474 = vmatpush1.msra.mxu0 0.0
        %1475 = vmatprep.subr.mxu0 0.0
        %1476 = vmatpush1.msra.mxu0 0.0
        %1477 = vmatprep.subr.mxu0 0.0
        %1478 = vmatpush1.msra.mxu0 %v615
        %1479 = vmatprep.subr.mxu0 0.0
        %1480 = vmatpush1.msra.mxu0 %v610
        %1481 = vmatprep.subr.mxu0 0.0
        %1482 = vmatpush1.msra.mxu0 %v605
        %1483 = vmatprep.subr.mxu0 0.0
        %1484 = vmatpush1.msra.mxu0 %v600
        %1485 = vmatprep.subr.mxu0 0.0
        %1486 = vmatpush2.msra.mxu0 0.0
        %1487 = vmatprep.subr.mxu0 0.0
        %1488 = vmatpush2.msra.mxu0 0.0
        %1489 = vmatprep.subr.mxu0 0.0
        %1490 = vmatpush2.msra.mxu0 0.0
        %1491 = vmatprep.subr.mxu0 0.0
        %1492 = vmatpush2.msra.mxu0 0.0
        %1493 = vmatprep.subr.mxu0 0.0
        %1494 = vmatpush2.msra.mxu0 0.0
        %1495 = vmatprep.subr.mxu0 0.0
        %1496 = vmatpush2.msra.mxu0 0.0
        %1497 = vmatprep.subr.mxu0 0.0
        %1498 = vmatpush2.msra.mxu0 0.0
        %1499 = vmatprep.subr.mxu0 0.0
        %1500 = vmatpush2.msra.mxu0 0.0
        %1501 = vmatprep.subr.mxu0 0.0
        %1502 = vmatpush2.msra.mxu0 0.0
        %1503 = vmatprep.subr.mxu0 0.0
        %1504 = vmatpush2.msra.mxu0 0.0
        %1505 = vmatprep.subr.mxu0 0.0
        %1506 = vmatpush2.msra.mxu0 0.0
        %1507 = vmatprep.subr.mxu0 0.0
        %1508 = vmatpush2.msra.mxu0 0.0
        %1509 = vmatprep.subr.mxu0 0.0
        %1510 = vmatpush2.msra.mxu0 0.0
        %1511 = vmatprep.subr.mxu0 0.0
        %1512 = vmatpush2.msra.mxu0 0.0
        %1513 = vmatprep.subr.mxu0 0.0
        %1514 = vmatpush2.msra.mxu0 0.0
        %1515 = vmatprep.subr.mxu0 0.0
        %1516 = vmatpush2.msra.mxu0 0.0
        %1517 = vmatprep.mubr.f32.mxu0 0.0
        %1518 = vmatmul.mubr.f32.gmra.mxu0 %v1406
        %v1519 = vpop.f32.mrf.mxu0
        %v1520 = vadd.f32 0.0, %v1519
        %v1521 = vpop.f32.mrf.mxu0
        %1522 = vmatprep.mubr.f32.mxu0 0.0
        %1523 = vmatmul.mubr.f32.gmra.mxu0 %v1409
        %v1524 = vpop.f32.mrf.mxu0
        %v1525 = vadd.f32 0.0, %v1524
        %v1526 = vpop.f32.mrf.mxu0
        %1527 = vmatprep.mubr.f32.mxu0 0.0
        %1528 = vmatmul.mubr.f32.gmra.mxu0 %v1412
        %v1529 = vpop.f32.mrf.mxu0
        %v1530 = vadd.f32 0.0, %v1529
        %v1531 = vpop.f32.mrf.mxu0
        %1532 = vmatprep.mubr.f32.mxu0 0.0
        %1533 = vmatmul.mubr.f32.gmra.mxu0 %v1415
        %v1534 = vpop.f32.mrf.mxu0
        %v1535 = vadd.f32 0.0, %v1534
        %v1536 = vpop.f32.mrf.mxu0
        %1537 = vmatprep.mubr.f32.mxu0 0.0
        %1538 = vmatmul.mubr.f32.gmra.mxu0 %v1418
        %v1539 = vpop.f32.mrf.mxu0
        %v1540 = vadd.f32 0.0, %v1539
        %v1541 = vpop.f32.mrf.mxu0
        %1542 = vmatprep.mubr.f32.mxu0 0.0
        %1543 = vmatmul.mubr.f32.gmra.mxu0 %v1421
        %v1544 = vpop.f32.mrf.mxu0
        %v1545 = vadd.f32 0.0, %v1544
        %v1546 = vpop.f32.mrf.mxu0
        %1547 = vmatprep.mubr.f32.mxu0 0.0
        %1548 = vmatmul.mubr.f32.gmra.mxu0 %v1424
        %v1549 = vpop.f32.mrf.mxu0
        %v1550 = vadd.f32 0.0, %v1549
        %v1551 = vpop.f32.mrf.mxu0
        %1552 = vmatprep.mubr.f32.mxu0 0.0
        %1553 = vmatmul.mubr.f32.gmra.mxu0 %v1427
        %v1554 = vpop.f32.mrf.mxu0
        %v1555 = vadd.f32 0.0, %v1554
        %v1556 = vpop.f32.mrf.mxu0
        %1557 = vmatprep.mubr.f32.mxu0 0.0
        %1558 = vmatmul.mubr.f32.gmra.mxu0 %v1430
        %v1559 = vpop.f32.mrf.mxu0
        %v1560 = vadd.f32 0.0, %v1559
        %v1561 = vpop.f32.mrf.mxu0
        %1562 = vmatprep.mubr.f32.mxu0 0.0
        %1563 = vmatmul.mubr.f32.gmra.mxu0 %v1433
        %v1564 = vpop.f32.mrf.mxu0
        %v1565 = vadd.f32 0.0, %v1564
        %v1566 = vpop.f32.mrf.mxu0
        %1567 = vmatprep.mubr.f32.mxu0 0.0
        %1568 = vmatmul.mubr.f32.gmra.mxu0 %v1436
        %v1569 = vpop.f32.mrf.mxu0
        %v1570 = vadd.f32 0.0, %v1569
        %v1571 = vpop.f32.mrf.mxu0
        %1572 = vmatprep.mubr.f32.mxu0 0.0
        %1573 = vmatmul.mubr.f32.gmra.mxu0 %v1439
        %v1574 = vpop.f32.mrf.mxu0
        %v1575 = vadd.f32 0.0, %v1574
        %v1576 = vpop.f32.mrf.mxu0
        %1577 = vmatprep.mubr.f32.mxu0 0.0
        %1578 = vmatmul.mubr.f32.gmra.mxu0 %v1442
        %v1579 = vpop.f32.mrf.mxu0
        %v1580 = vadd.f32 0.0, %v1579
        %v1581 = vpop.f32.mrf.mxu0
        %1582 = vmatprep.mubr.f32.mxu0 0.0
        %1583 = vmatmul.mubr.f32.gmra.mxu0 %v1445
        %v1584 = vpop.f32.mrf.mxu0
        %v1585 = vadd.f32 0.0, %v1584
        %v1586 = vpop.f32.mrf.mxu0
        %1587 = vmatprep.mubr.f32.mxu0 0.0
        %1588 = vmatmul.mubr.f32.gmra.mxu0 %v1448
        %v1589 = vpop.f32.mrf.mxu0
        %v1590 = vadd.f32 0.0, %v1589
        %v1591 = vpop.f32.mrf.mxu0
        %1592 = vmatprep.mubr.f32.mxu0 0.0
        %1593 = vmatmul.mubr.f32.gmra.mxu0 %v1451
        %v1594 = vpop.f32.mrf.mxu0
        %v1595 = vadd.f32 0.0, %v1594
        %v1596 = vpop.f32.mrf.mxu0
        %1597 = vdwg.mxu0
        %v1598 = vmul.f32 %v845, 0.17677669
        %v1599 = vmul.f32 %v850, 0.17677669
        %v1600 = vmul.f32 %v855, 0.17677669
        %v1601 = vmul.f32 %v860, 0.17677669
        %v1602 = vmul.f32 %v865, 0.17677669
        %v1603 = vmul.f32 %v870, 0.17677669
        %v1604 = vmul.f32 %v875, 0.17677669
        %v1605 = vmul.f32 %v880, 0.17677669
        %v1606 = vmul.f32 %v885, 0.17677669
        %v1607 = vmul.f32 %v890, 0.17677669
        %v1608 = vmul.f32 %v895, 0.17677669
        %v1609 = vmul.f32 %v900, 0.17677669
        %v1610 = vmul.f32 %v905, 0.17677669
        %v1611 = vmul.f32 %v910, 0.17677669
        %v1612 = vmul.f32 %v915, 0.17677669
        %v1613 = vmul.f32 %v920, 0.17677669
        %v1614 = vmul.f32 %v1070, 0.17677669
        %v1615 = vmul.f32 %v1075, 0.17677669
        %v1616 = vmul.f32 %v1080, 0.17677669
        %v1617 = vmul.f32 %v1085, 0.17677669
        %v1618 = vmul.f32 %v1090, 0.17677669
        %v1619 = vmul.f32 %v1095, 0.17677669
        %v1620 = vmul.f32 %v1100, 0.17677669
        %v1621 = vmul.f32 %v1105, 0.17677669
        %v1622 = vmul.f32 %v1110, 0.17677669
        %v1623 = vmul.f32 %v1115, 0.17677669
        %v1624 = vmul.f32 %v1120, 0.17677669
        %v1625 = vmul.f32 %v1125, 0.17677669
        %v1626 = vmul.f32 %v1130, 0.17677669
        %v1627 = vmul.f32 %v1135, 0.17677669
        %v1628 = vmul.f32 %v1140, 0.17677669
        %v1629 = vmul.f32 %v1145, 0.17677669
        %v1630 = vmul.f32 %v1295, 0.17677669
        %v1631 = vmul.f32 %v1300, 0.17677669
        %v1632 = vmul.f32 %v1305, 0.17677669
        %v1633 = vmul.f32 %v1310, 0.17677669
        %v1634 = vmul.f32 %v1315, 0.17677669
        %v1635 = vmul.f32 %v1320, 0.17677669
        %v1636 = vmul.f32 %v1325, 0.17677669
        %v1637 = vmul.f32 %v1330, 0.17677669
        %v1638 = vmul.f32 %v1335, 0.17677669
        %v1639 = vmul.f32 %v1340, 0.17677669
        %v1640 = vmul.f32 %v1345, 0.17677669
        %v1641 = vmul.f32 %v1350, 0.17677669
        %v1642 = vmul.f32 %v1355, 0.17677669
        %v1643 = vmul.f32 %v1360, 0.17677669
        %v1644 = vmul.f32 %v1365, 0.17677669
        %v1645 = vmul.f32 %v1370, 0.17677669
        %v1646 = vmul.f32 %v1520, 0.17677669
        %v1647 = vmul.f32 %v1525, 0.17677669
        %v1648 = vmul.f32 %v1530, 0.17677669
        %v1649 = vmul.f32 %v1535, 0.17677669
        %v1650 = vmul.f32 %v1540, 0.17677669
        %v1651 = vmul.f32 %v1545, 0.17677669
        %v1652 = vmul.f32 %v1550, 0.17677669
        %v1653 = vmul.f32 %v1555, 0.17677669
        %v1654 = vmul.f32 %v1560, 0.17677669
        %v1655 = vmul.f32 %v1565, 0.17677669
        %v1656 = vmul.f32 %v1570, 0.17677669
        %v1657 = vmul.f32 %v1575, 0.17677669
        %v1658 = vmul.f32 %v1580, 0.17677669
        %v1659 = vmul.f32 %v1585, 0.17677669
        %v1660 = vmul.f32 %v1590, 0.17677669
        %v1661 = vmul.f32 %v1595, 0.17677669
        %1662 = vmax.xlane.f32.xlu0 %v1598
        %v1663 = vpop.xlane.xlu0 %1662
        %1664 = vmax.xlane.f32.xlu0 %v1599
        %v1665 = vpop.xlane.xlu0 %1664
        %1666 = vmax.xlane.f32.xlu0 %v1600
        %v1667 = vpop.xlane.xlu0 %1666
        %1668 = vmax.xlane.f32.xlu0 %v1601
        %v1669 = vpop.xlane.xlu0 %1668
        %1670 = vmax.xlane.f32.xlu0 %v1602
        %v1671 = vpop.xlane.xlu0 %1670
        %1672 = vmax.xlane.f32.xlu0 %v1603
        %v1673 = vpop.xlane.xlu0 %1672
        %1674 = vmax.xlane.f32.xlu0 %v1604
        %v1675 = vpop.xlane.xlu0 %1674
        %1676 = vmax.xlane.f32.xlu0 %v1605
        %v1677 = vpop.xlane.xlu0 %1676
        %1678 = vmax.xlane.f32.xlu0 %v1606
        %v1679 = vpop.xlane.xlu0 %1678
        %1680 = vmax.xlane.f32.xlu0 %v1607
        %v1681 = vpop.xlane.xlu0 %1680
        %1682 = vmax.xlane.f32.xlu0 %v1608
        %v1683 = vpop.xlane.xlu0 %1682
        %1684 = vmax.xlane.f32.xlu0 %v1609
        %v1685 = vpop.xlane.xlu0 %1684
        %1686 = vmax.xlane.f32.xlu0 %v1610
        %v1687 = vpop.xlane.xlu0 %1686
        %1688 = vmax.xlane.f32.xlu0 %v1611
        %v1689 = vpop.xlane.xlu0 %1688
        %1690 = vmax.xlane.f32.xlu0 %v1612
        %v1691 = vpop.xlane.xlu0 %1690
        %1692 = vmax.xlane.f32.xlu0 %v1613
        %v1693 = vpop.xlane.xlu0 %1692
        %1694 = vmax.xlane.f32.xlu0 %v1614
        %v1695 = vpop.xlane.xlu0 %1694
        %1696 = vmax.xlane.f32.xlu0 %v1615
        %v1697 = vpop.xlane.xlu0 %1696
        %1698 = vmax.xlane.f32.xlu0 %v1616
        %v1699 = vpop.xlane.xlu0 %1698
        %1700 = vmax.xlane.f32.xlu0 %v1617
        %v1701 = vpop.xlane.xlu0 %1700
        %1702 = vmax.xlane.f32.xlu0 %v1618
        %v1703 = vpop.xlane.xlu0 %1702
        %1704 = vmax.xlane.f32.xlu0 %v1619
        %v1705 = vpop.xlane.xlu0 %1704
        %1706 = vmax.xlane.f32.xlu0 %v1620
        %v1707 = vpop.xlane.xlu0 %1706
        %1708 = vmax.xlane.f32.xlu0 %v1621
        %v1709 = vpop.xlane.xlu0 %1708
        %1710 = vmax.xlane.f32.xlu0 %v1622
        %v1711 = vpop.xlane.xlu0 %1710
        %1712 = vmax.xlane.f32.xlu0 %v1623
        %v1713 = vpop.xlane.xlu0 %1712
        %1714 = vmax.xlane.f32.xlu0 %v1624
        %v1715 = vpop.xlane.xlu0 %1714
        %1716 = vmax.xlane.f32.xlu0 %v1625
        %v1717 = vpop.xlane.xlu0 %1716
        %1718 = vmax.xlane.f32.xlu0 %v1626
        %v1719 = vpop.xlane.xlu0 %1718
        %1720 = vmax.xlane.f32.xlu0 %v1627
        %v1721 = vpop.xlane.xlu0 %1720
        %1722 = vmax.xlane.f32.xlu0 %v1628
        %v1723 = vpop.xlane.xlu0 %1722
        %1724 = vmax.xlane.f32.xlu0 %v1629
        %v1725 = vpop.xlane.xlu0 %1724
        %1726 = vmax.xlane.f32.xlu0 %v1630
        %v1727 = vpop.xlane.xlu0 %1726
        %1728 = vmax.xlane.f32.xlu0 %v1631
        %v1729 = vpop.xlane.xlu0 %1728
        %1730 = vmax.xlane.f32.xlu0 %v1632
        %v1731 = vpop.xlane.xlu0 %1730
        %1732 = vmax.xlane.f32.xlu0 %v1633
        %v1733 = vpop.xlane.xlu0 %1732
        %1734 = vmax.xlane.f32.xlu0 %v1634
        %v1735 = vpop.xlane.xlu0 %1734
        %1736 = vmax.xlane.f32.xlu0 %v1635
        %v1737 = vpop.xlane.xlu0 %1736
        %1738 = vmax.xlane.f32.xlu0 %v1636
        %v1739 = vpop.xlane.xlu0 %1738
        %1740 = vmax.xlane.f32.xlu0 %v1637
        %v1741 = vpop.xlane.xlu0 %1740
        %1742 = vmax.xlane.f32.xlu0 %v1638
        %v1743 = vpop.xlane.xlu0 %1742
        %1744 = vmax.xlane.f32.xlu0 %v1639
        %v1745 = vpop.xlane.xlu0 %1744
        %1746 = vmax.xlane.f32.xlu0 %v1640
        %v1747 = vpop.xlane.xlu0 %1746
        %1748 = vmax.xlane.f32.xlu0 %v1641
        %v1749 = vpop.xlane.xlu0 %1748
        %1750 = vmax.xlane.f32.xlu0 %v1642
        %v1751 = vpop.xlane.xlu0 %1750
        %1752 = vmax.xlane.f32.xlu0 %v1643
        %v1753 = vpop.xlane.xlu0 %1752
        %1754 = vmax.xlane.f32.xlu0 %v1644
        %v1755 = vpop.xlane.xlu0 %1754
        %1756 = vmax.xlane.f32.xlu0 %v1645
        %v1757 = vpop.xlane.xlu0 %1756
        %1758 = vmax.xlane.f32.xlu0 %v1646
        %v1759 = vpop.xlane.xlu0 %1758
        %1760 = vmax.xlane.f32.xlu0 %v1647
        %v1761 = vpop.xlane.xlu0 %1760
        %1762 = vmax.xlane.f32.xlu0 %v1648
        %v1763 = vpop.xlane.xlu0 %1762
        %1764 = vmax.xlane.f32.xlu0 %v1649
        %v1765 = vpop.xlane.xlu0 %1764
        %1766 = vmax.xlane.f32.xlu0 %v1650
        %v1767 = vpop.xlane.xlu0 %1766
        %1768 = vmax.xlane.f32.xlu0 %v1651
        %v1769 = vpop.xlane.xlu0 %1768
        %1770 = vmax.xlane.f32.xlu0 %v1652
        %v1771 = vpop.xlane.xlu0 %1770
        %1772 = vmax.xlane.f32.xlu0 %v1653
        %v1773 = vpop.xlane.xlu0 %1772
        %1774 = vmax.xlane.f32.xlu0 %v1654
        %v1775 = vpop.xlane.xlu0 %1774
        %1776 = vmax.xlane.f32.xlu0 %v1655
        %v1777 = vpop.xlane.xlu0 %1776
        %1778 = vmax.xlane.f32.xlu0 %v1656
        %v1779 = vpop.xlane.xlu0 %1778
        %1780 = vmax.xlane.f32.xlu0 %v1657
        %v1781 = vpop.xlane.xlu0 %1780
        %1782 = vmax.xlane.f32.xlu0 %v1658
        %v1783 = vpop.xlane.xlu0 %1782
        %1784 = vmax.xlane.f32.xlu0 %v1659
        %v1785 = vpop.xlane.xlu0 %1784
        %1786 = vmax.xlane.f32.xlu0 %v1660
        %v1787 = vpop.xlane.xlu0 %1786
        %1788 = vmax.xlane.f32.xlu0 %v1661
        %v1789 = vpop.xlane.xlu0 %1788
        %v1790 = vsub.f32 %v1598, %v1663
        %v1791 = vsub.f32 %v1599, %v1665
        %v1792 = vsub.f32 %v1600, %v1667
        %v1793 = vsub.f32 %v1601, %v1669
        %v1794 = vsub.f32 %v1602, %v1671
        %v1795 = vsub.f32 %v1603, %v1673
        %v1796 = vsub.f32 %v1604, %v1675
        %v1797 = vsub.f32 %v1605, %v1677
        %v1798 = vsub.f32 %v1606, %v1679
        %v1799 = vsub.f32 %v1607, %v1681
        %v1800 = vsub.f32 %v1608, %v1683
        %v1801 = vsub.f32 %v1609, %v1685
        %v1802 = vsub.f32 %v1610, %v1687
        %v1803 = vsub.f32 %v1611, %v1689
        %v1804 = vsub.f32 %v1612, %v1691
        %v1805 = vsub.f32 %v1613, %v1693
        %v1806 = vsub.f32 %v1614, %v1695
        %v1807 = vsub.f32 %v1615, %v1697
        %v1808 = vsub.f32 %v1616, %v1699
        %v1809 = vsub.f32 %v1617, %v1701
        %v1810 = vsub.f32 %v1618, %v1703
        %v1811 = vsub.f32 %v1619, %v1705
        %v1812 = vsub.f32 %v1620, %v1707
        %v1813 = vsub.f32 %v1621, %v1709
        %v1814 = vsub.f32 %v1622, %v1711
        %v1815 = vsub.f32 %v1623, %v1713
        %v1816 = vsub.f32 %v1624, %v1715
        %v1817 = vsub.f32 %v1625, %v1717
        %v1818 = vsub.f32 %v1626, %v1719
        %v1819 = vsub.f32 %v1627, %v1721
        %v1820 = vsub.f32 %v1628, %v1723
        %v1821 = vsub.f32 %v1629, %v1725
        %v1822 = vsub.f32 %v1630, %v1727
        %v1823 = vsub.f32 %v1631, %v1729
        %v1824 = vsub.f32 %v1632, %v1731
        %v1825 = vsub.f32 %v1633, %v1733
        %v1826 = vsub.f32 %v1634, %v1735
        %v1827 = vsub.f32 %v1635, %v1737
        %v1828 = vsub.f32 %v1636, %v1739
        %v1829 = vsub.f32 %v1637, %v1741
        %v1830 = vsub.f32 %v1638, %v1743
        %v1831 = vsub.f32 %v1639, %v1745
        %v1832 = vsub.f32 %v1640, %v1747
        %v1833 = vsub.f32 %v1641, %v1749
        %v1834 = vsub.f32 %v1642, %v1751
        %v1835 = vsub.f32 %v1643, %v1753
        %v1836 = vsub.f32 %v1644, %v1755
        %v1837 = vsub.f32 %v1645, %v1757
        %v1838 = vsub.f32 %v1646, %v1759
        %v1839 = vsub.f32 %v1647, %v1761
        %v1840 = vsub.f32 %v1648, %v1763
        %v1841 = vsub.f32 %v1649, %v1765
        %v1842 = vsub.f32 %v1650, %v1767
        %v1843 = vsub.f32 %v1651, %v1769
        %v1844 = vsub.f32 %v1652, %v1771
        %v1845 = vsub.f32 %v1653, %v1773
        %v1846 = vsub.f32 %v1654, %v1775
        %v1847 = vsub.f32 %v1655, %v1777
        %v1848 = vsub.f32 %v1656, %v1779
        %v1849 = vsub.f32 %v1657, %v1781
        %v1850 = vsub.f32 %v1658, %v1783
        %v1851 = vsub.f32 %v1659, %v1785
        %v1852 = vsub.f32 %v1660, %v1787
        %v1853 = vsub.f32 %v1661, %v1789
        %v1854 = vmul.f32 %v1790, 1.442695
        %v1855 = vpow.pop %v1854
        %v1856 = vmul.f32 %v1791, 1.442695
        %v1857 = vpow.pop %v1856
        %v1858 = vmul.f32 %v1792, 1.442695
        %v1859 = vpow.pop %v1858
        %v1860 = vmul.f32 %v1793, 1.442695
        %v1861 = vpow.pop %v1860
        %v1862 = vmul.f32 %v1794, 1.442695
        %v1863 = vpow.pop %v1862
        %v1864 = vmul.f32 %v1795, 1.442695
        %v1865 = vpow.pop %v1864
        %v1866 = vmul.f32 %v1796, 1.442695
        %v1867 = vpow.pop %v1866
        %v1868 = vmul.f32 %v1797, 1.442695
        %v1869 = vpow.pop %v1868
        %v1870 = vmul.f32 %v1798, 1.442695
        %v1871 = vpow.pop %v1870
        %v1872 = vmul.f32 %v1799, 1.442695
        %v1873 = vpow.pop %v1872
        %v1874 = vmul.f32 %v1800, 1.442695
        %v1875 = vpow.pop %v1874
        %v1876 = vmul.f32 %v1801, 1.442695
        %v1877 = vpow.pop %v1876
        %v1878 = vmul.f32 %v1802, 1.442695
        %v1879 = vpow.pop %v1878
        %v1880 = vmul.f32 %v1803, 1.442695
        %v1881 = vpow.pop %v1880
        %v1882 = vmul.f32 %v1804, 1.442695
        %v1883 = vpow.pop %v1882
        %v1884 = vmul.f32 %v1805, 1.442695
        %v1885 = vpow.pop %v1884
        %v1886 = vmul.f32 %v1806, 1.442695
        %v1887 = vpow.pop %v1886
        %v1888 = vmul.f32 %v1807, 1.442695
        %v1889 = vpow.pop %v1888
        %v1890 = vmul.f32 %v1808, 1.442695
        %v1891 = vpow.pop %v1890
        %v1892 = vmul.f32 %v1809, 1.442695
        %v1893 = vpow.pop %v1892
        %v1894 = vmul.f32 %v1810, 1.442695
        %v1895 = vpow.pop %v1894
        %v1896 = vmul.f32 %v1811, 1.442695
        %v1897 = vpow.pop %v1896
        %v1898 = vmul.f32 %v1812, 1.442695
        %v1899 = vpow.pop %v1898
        %v1900 = vmul.f32 %v1813, 1.442695
        %v1901 = vpow.pop %v1900
        %v1902 = vmul.f32 %v1814, 1.442695
        %v1903 = vpow.pop %v1902
        %v1904 = vmul.f32 %v1815, 1.442695
        %v1905 = vpow.pop %v1904
        %v1906 = vmul.f32 %v1816, 1.442695
        %v1907 = vpow.pop %v1906
        %v1908 = vmul.f32 %v1817, 1.442695
        %v1909 = vpow.pop %v1908
        %v1910 = vmul.f32 %v1818, 1.442695
        %v1911 = vpow.pop %v1910
        %v1912 = vmul.f32 %v1819, 1.442695
        %v1913 = vpow.pop %v1912
        %v1914 = vmul.f32 %v1820, 1.442695
        %v1915 = vpow.pop %v1914
        %v1916 = vmul.f32 %v1821, 1.442695
        %v1917 = vpow.pop %v1916
        %v1918 = vmul.f32 %v1822, 1.442695
        %v1919 = vpow.pop %v1918
        %v1920 = vmul.f32 %v1823, 1.442695
        %v1921 = vpow.pop %v1920
        %v1922 = vmul.f32 %v1824, 1.442695
        %v1923 = vpow.pop %v1922
        %v1924 = vmul.f32 %v1825, 1.442695
        %v1925 = vpow.pop %v1924
        %v1926 = vmul.f32 %v1826, 1.442695
        %v1927 = vpow.pop %v1926
        %v1928 = vmul.f32 %v1827, 1.442695
        %v1929 = vpow.pop %v1928
        %v1930 = vmul.f32 %v1828, 1.442695
        %v1931 = vpow.pop %v1930
        %v1932 = vmul.f32 %v1829, 1.442695
        %v1933 = vpow.pop %v1932
        %v1934 = vmul.f32 %v1830, 1.442695
        %v1935 = vpow.pop %v1934
        %v1936 = vmul.f32 %v1831, 1.442695
        %v1937 = vpow.pop %v1936
        %v1938 = vmul.f32 %v1832, 1.442695
        %v1939 = vpow.pop %v1938
        %v1940 = vmul.f32 %v1833, 1.442695
        %v1941 = vpow.pop %v1940
        %v1942 = vmul.f32 %v1834, 1.442695
        %v1943 = vpow.pop %v1942
        %v1944 = vmul.f32 %v1835, 1.442695
        %v1945 = vpow.pop %v1944
        %v1946 = vmul.f32 %v1836, 1.442695
        %v1947 = vpow.pop %v1946
        %v1948 = vmul.f32 %v1837, 1.442695
        %v1949 = vpow.pop %v1948
        %v1950 = vmul.f32 %v1838, 1.442695
        %v1951 = vpow.pop %v1950
        %v1952 = vmul.f32 %v1839, 1.442695
        %v1953 = vpow.pop %v1952
        %v1954 = vmul.f32 %v1840, 1.442695
        %v1955 = vpow.pop %v1954
        %v1956 = vmul.f32 %v1841, 1.442695
        %v1957 = vpow.pop %v1956
        %v1958 = vmul.f32 %v1842, 1.442695
        %v1959 = vpow.pop %v1958
        %v1960 = vmul.f32 %v1843, 1.442695
        %v1961 = vpow.pop %v1960
        %v1962 = vmul.f32 %v1844, 1.442695
        %v1963 = vpow.pop %v1962
        %v1964 = vmul.f32 %v1845, 1.442695
        %v1965 = vpow.pop %v1964
        %v1966 = vmul.f32 %v1846, 1.442695
        %v1967 = vpow.pop %v1966
        %v1968 = vmul.f32 %v1847, 1.442695
        %v1969 = vpow.pop %v1968
        %v1970 = vmul.f32 %v1848, 1.442695
        %v1971 = vpow.pop %v1970
        %v1972 = vmul.f32 %v1849, 1.442695
        %v1973 = vpow.pop %v1972
        %v1974 = vmul.f32 %v1850, 1.442695
        %v1975 = vpow.pop %v1974
        %v1976 = vmul.f32 %v1851, 1.442695
        %v1977 = vpow.pop %v1976
        %v1978 = vmul.f32 %v1852, 1.442695
        %v1979 = vpow.pop %v1978
        %v1980 = vmul.f32 %v1853, 1.442695
        %v1981 = vpow.pop %v1980
        %1982 = vadd.xlane.f32.xlu0 %v1855
        %v1983 = vpop.xlane.xlu0 %1982
        %1984 = vadd.xlane.f32.xlu0 %v1857
        %v1985 = vpop.xlane.xlu0 %1984
        %1986 = vadd.xlane.f32.xlu0 %v1859
        %v1987 = vpop.xlane.xlu0 %1986
        %1988 = vadd.xlane.f32.xlu0 %v1861
        %v1989 = vpop.xlane.xlu0 %1988
        %1990 = vadd.xlane.f32.xlu0 %v1863
        %v1991 = vpop.xlane.xlu0 %1990
        %1992 = vadd.xlane.f32.xlu0 %v1865
        %v1993 = vpop.xlane.xlu0 %1992
        %1994 = vadd.xlane.f32.xlu0 %v1867
        %v1995 = vpop.xlane.xlu0 %1994
        %1996 = vadd.xlane.f32.xlu0 %v1869
        %v1997 = vpop.xlane.xlu0 %1996
        %1998 = vadd.xlane.f32.xlu0 %v1871
        %v1999 = vpop.xlane.xlu0 %1998
        %2000 = vadd.xlane.f32.xlu0 %v1873
        %v2001 = vpop.xlane.xlu0 %2000
        %2002 = vadd.xlane.f32.xlu0 %v1875
        %v2003 = vpop.xlane.xlu0 %2002
        %2004 = vadd.xlane.f32.xlu0 %v1877
        %v2005 = vpop.xlane.xlu0 %2004
        %2006 = vadd.xlane.f32.xlu0 %v1879
        %v2007 = vpop.xlane.xlu0 %2006
        %2008 = vadd.xlane.f32.xlu0 %v1881
        %v2009 = vpop.xlane.xlu0 %2008
        %2010 = vadd.xlane.f32.xlu0 %v1883
        %v2011 = vpop.xlane.xlu0 %2010
        %2012 = vadd.xlane.f32.xlu0 %v1885
        %v2013 = vpop.xlane.xlu0 %2012
        %2014 = vadd.xlane.f32.xlu0 %v1887
        %v2015 = vpop.xlane.xlu0 %2014
        %2016 = vadd.xlane.f32.xlu0 %v1889
        %v2017 = vpop.xlane.xlu0 %2016
        %2018 = vadd.xlane.f32.xlu0 %v1891
        %v2019 = vpop.xlane.xlu0 %2018
        %2020 = vadd.xlane.f32.xlu0 %v1893
        %v2021 = vpop.xlane.xlu0 %2020
        %2022 = vadd.xlane.f32.xlu0 %v1895
        %v2023 = vpop.xlane.xlu0 %2022
        %2024 = vadd.xlane.f32.xlu0 %v1897
        %v2025 = vpop.xlane.xlu0 %2024
        %2026 = vadd.xlane.f32.xlu0 %v1899
        %v2027 = vpop.xlane.xlu0 %2026
        %2028 = vadd.xlane.f32.xlu0 %v1901
        %v2029 = vpop.xlane.xlu0 %2028
        %2030 = vadd.xlane.f32.xlu0 %v1903
        %v2031 = vpop.xlane.xlu0 %2030
        %2032 = vadd.xlane.f32.xlu0 %v1905
        %v2033 = vpop.xlane.xlu0 %2032
        %2034 = vadd.xlane.f32.xlu0 %v1907
        %v2035 = vpop.xlane.xlu0 %2034
        %2036 = vadd.xlane.f32.xlu0 %v1909
        %v2037 = vpop.xlane.xlu0 %2036
        %2038 = vadd.xlane.f32.xlu0 %v1911
        %v2039 = vpop.xlane.xlu0 %2038
        %2040 = vadd.xlane.f32.xlu0 %v1913
        %v2041 = vpop.xlane.xlu0 %2040
        %2042 = vadd.xlane.f32.xlu0 %v1915
        %v2043 = vpop.xlane.xlu0 %2042
        %2044 = vadd.xlane.f32.xlu0 %v1917
        %v2045 = vpop.xlane.xlu0 %2044
        %2046 = vadd.xlane.f32.xlu0 %v1919
        %v2047 = vpop.xlane.xlu0 %2046
        %2048 = vadd.xlane.f32.xlu0 %v1921
        %v2049 = vpop.xlane.xlu0 %2048
        %2050 = vadd.xlane.f32.xlu0 %v1923
        %v2051 = vpop.xlane.xlu0 %2050
        %2052 = vadd.xlane.f32.xlu0 %v1925
        %v2053 = vpop.xlane.xlu0 %2052
        %2054 = vadd.xlane.f32.xlu0 %v1927
        %v2055 = vpop.xlane.xlu0 %2054
        %2056 = vadd.xlane.f32.xlu0 %v1929
        %v2057 = vpop.xlane.xlu0 %2056
        %2058 = vadd.xlane.f32.xlu0 %v1931
        %v2059 = vpop.xlane.xlu0 %2058
        %2060 = vadd.xlane.f32.xlu0 %v1933
        %v2061 = vpop.xlane.xlu0 %2060
        %2062 = vadd.xlane.f32.xlu0 %v1935
        %v2063 = vpop.xlane.xlu0 %2062
        %2064 = vadd.xlane.f32.xlu0 %v1937
        %v2065 = vpop.xlane.xlu0 %2064
        %2066 = vadd.xlane.f32.xlu0 %v1939
        %v2067 = vpop.xlane.xlu0 %2066
        %2068 = vadd.xlane.f32.xlu0 %v1941
        %v2069 = vpop.xlane.xlu0 %2068
        %2070 = vadd.xlane.f32.xlu0 %v1943
        %v2071 = vpop.xlane.xlu0 %2070
        %2072 = vadd.xlane.f32.xlu0 %v1945
        %v2073 = vpop.xlane.xlu0 %2072
        %2074 = vadd.xlane.f32.xlu0 %v1947
        %v2075 = vpop.xlane.xlu0 %2074
        %2076 = vadd.xlane.f32.xlu0 %v1949
        %v2077 = vpop.xlane.xlu0 %2076
        %2078 = vadd.xlane.f32.xlu0 %v1951
        %v2079 = vpop.xlane.xlu0 %2078
        %2080 = vadd.xlane.f32.xlu0 %v1953
        %v2081 = vpop.xlane.xlu0 %2080
        %2082 = vadd.xlane.f32.xlu0 %v1955
        %v2083 = vpop.xlane.xlu0 %2082
        %2084 = vadd.xlane.f32.xlu0 %v1957
        %v2085 = vpop.xlane.xlu0 %2084
        %2086 = vadd.xlane.f32.xlu0 %v1959
        %v2087 = vpop.xlane.xlu0 %2086
        %2088 = vadd.xlane.f32.xlu0 %v1961
        %v2089 = vpop.xlane.xlu0 %2088
        %2090 = vadd.xlane.f32.xlu0 %v1963
        %v2091 = vpop.xlane.xlu0 %2090
        %2092 = vadd.xlane.f32.xlu0 %v1965
        %v2093 = vpop.xlane.xlu0 %2092
        %2094 = vadd.xlane.f32.xlu0 %v1967
        %v2095 = vpop.xlane.xlu0 %2094
        %2096 = vadd.xlane.f32.xlu0 %v1969
        %v2097 = vpop.xlane.xlu0 %2096
        %2098 = vadd.xlane.f32.xlu0 %v1971
        %v2099 = vpop.xlane.xlu0 %2098
        %2100 = vadd.xlane.f32.xlu0 %v1973
        %v2101 = vpop.xlane.xlu0 %2100
        %2102 = vadd.xlane.f32.xlu0 %v1975
        %v2103 = vpop.xlane.xlu0 %2102
        %2104 = vadd.xlane.f32.xlu0 %v1977
        %v2105 = vpop.xlane.xlu0 %2104
        %2106 = vadd.xlane.f32.xlu0 %v1979
        %v2107 = vpop.xlane.xlu0 %2106
        %2108 = vadd.xlane.f32.xlu0 %v1981
        %v2109 = vpop.xlane.xlu0 %2108
        %v2110 = vrcp.pop %v1983
        %v2111 = vrcp.pop %v1985
        %v2112 = vrcp.pop %v1987
        %v2113 = vrcp.pop %v1989
        %v2114 = vrcp.pop %v1991
        %v2115 = vrcp.pop %v1993
        %v2116 = vrcp.pop %v1995
        %v2117 = vrcp.pop %v1997
        %v2118 = vrcp.pop %v1999
        %v2119 = vrcp.pop %v2001
        %v2120 = vrcp.pop %v2003
        %v2121 = vrcp.pop %v2005
        %v2122 = vrcp.pop %v2007
        %v2123 = vrcp.pop %v2009
        %v2124 = vrcp.pop %v2011
        %v2125 = vrcp.pop %v2013
        %v2126 = vrcp.pop %v2015
        %v2127 = vrcp.pop %v2017
        %v2128 = vrcp.pop %v2019
        %v2129 = vrcp.pop %v2021
        %v2130 = vrcp.pop %v2023
        %v2131 = vrcp.pop %v2025
        %v2132 = vrcp.pop %v2027
        %v2133 = vrcp.pop %v2029
        %v2134 = vrcp.pop %v2031
        %v2135 = vrcp.pop %v2033
        %v2136 = vrcp.pop %v2035
        %v2137 = vrcp.pop %v2037
        %v2138 = vrcp.pop %v2039
        %v2139 = vrcp.pop %v2041
        %v2140 = vrcp.pop %v2043
        %v2141 = vrcp.pop %v2045
        %v2142 = vrcp.pop %v2047
        %v2143 = vrcp.pop %v2049
        %v2144 = vrcp.pop %v2051
        %v2145 = vrcp.pop %v2053
        %v2146 = vrcp.pop %v2055
        %v2147 = vrcp.pop %v2057
        %v2148 = vrcp.pop %v2059
        %v2149 = vrcp.pop %v2061
        %v2150 = vrcp.pop %v2063
        %v2151 = vrcp.pop %v2065
        %v2152 = vrcp.pop %v2067
        %v2153 = vrcp.pop %v2069
        %v2154 = vrcp.pop %v2071
        %v2155 = vrcp.pop %v2073
        %v2156 = vrcp.pop %v2075
        %v2157 = vrcp.pop %v2077
        %v2158 = vrcp.pop %v2079
        %v2159 = vrcp.pop %v2081
        %v2160 = vrcp.pop %v2083
        %v2161 = vrcp.pop %v2085
        %v2162 = vrcp.pop %v2087
        %v2163 = vrcp.pop %v2089
        %v2164 = vrcp.pop %v2091
        %v2165 = vrcp.pop %v2093
        %v2166 = vrcp.pop %v2095
        %v2167 = vrcp.pop %v2097
        %v2168 = vrcp.pop %v2099
        %v2169 = vrcp.pop %v2101
        %v2170 = vrcp.pop %v2103
        %v2171 = vrcp.pop %v2105
        %v2172 = vrcp.pop %v2107
        %v2173 = vrcp.pop %v2109
        %v2174 = vmul.f32 %v1855, %v2110
        %v2175 = vmul.f32 %v1857, %v2111
        %v2176 = vmul.f32 %v1859, %v2112
        %v2177 = vmul.f32 %v1861, %v2113
        %v2178 = vmul.f32 %v1863, %v2114
        %v2179 = vmul.f32 %v1865, %v2115
        %v2180 = vmul.f32 %v1867, %v2116
        %v2181 = vmul.f32 %v1869, %v2117
        %v2182 = vmul.f32 %v1871, %v2118
        %v2183 = vmul.f32 %v1873, %v2119
        %v2184 = vmul.f32 %v1875, %v2120
        %v2185 = vmul.f32 %v1877, %v2121
        %v2186 = vmul.f32 %v1879, %v2122
        %v2187 = vmul.f32 %v1881, %v2123
        %v2188 = vmul.f32 %v1883, %v2124
        %v2189 = vmul.f32 %v1885, %v2125
        %v2190 = vmul.f32 %v1887, %v2126
        %v2191 = vmul.f32 %v1889, %v2127
        %v2192 = vmul.f32 %v1891, %v2128
        %v2193 = vmul.f32 %v1893, %v2129
        %v2194 = vmul.f32 %v1895, %v2130
        %v2195 = vmul.f32 %v1897, %v2131
        %v2196 = vmul.f32 %v1899, %v2132
        %v2197 = vmul.f32 %v1901, %v2133
        %v2198 = vmul.f32 %v1903, %v2134
        %v2199 = vmul.f32 %v1905, %v2135
        %v2200 = vmul.f32 %v1907, %v2136
        %v2201 = vmul.f32 %v1909, %v2137
        %v2202 = vmul.f32 %v1911, %v2138
        %v2203 = vmul.f32 %v1913, %v2139
        %v2204 = vmul.f32 %v1915, %v2140
        %v2205 = vmul.f32 %v1917, %v2141
        %v2206 = vmul.f32 %v1919, %v2142
        %v2207 = vmul.f32 %v1921, %v2143
        %v2208 = vmul.f32 %v1923, %v2144
        %v2209 = vmul.f32 %v1925, %v2145
        %v2210 = vmul.f32 %v1927, %v2146
        %v2211 = vmul.f32 %v1929, %v2147
        %v2212 = vmul.f32 %v1931, %v2148
        %v2213 = vmul.f32 %v1933, %v2149
        %v2214 = vmul.f32 %v1935, %v2150
        %v2215 = vmul.f32 %v1937, %v2151
        %v2216 = vmul.f32 %v1939, %v2152
        %v2217 = vmul.f32 %v1941, %v2153
        %v2218 = vmul.f32 %v1943, %v2154
        %v2219 = vmul.f32 %v1945, %v2155
        %v2220 = vmul.f32 %v1947, %v2156
        %v2221 = vmul.f32 %v1949, %v2157
        %v2222 = vmul.f32 %v1951, %v2158
        %v2223 = vmul.f32 %v1953, %v2159
        %v2224 = vmul.f32 %v1955, %v2160
        %v2225 = vmul.f32 %v1957, %v2161
        %v2226 = vmul.f32 %v1959, %v2162
        %v2227 = vmul.f32 %v1961, %v2163
        %v2228 = vmul.f32 %v1963, %v2164
        %v2229 = vmul.f32 %v1965, %v2165
        %v2230 = vmul.f32 %v1967, %v2166
        %v2231 = vmul.f32 %v1969, %v2167
        %v2232 = vmul.f32 %v1971, %v2168
        %v2233 = vmul.f32 %v1973, %v2169
        %v2234 = vmul.f32 %v1975, %v2170
        %v2235 = vmul.f32 %v1977, %v2171
        %v2236 = vmul.f32 %v1979, %v2172
        %v2237 = vmul.f32 %v1981, %v2173
        %2238 = vmatprep.subr.mxu0 0.0
        %2239 = vmatpush1.xpose.msra.mxu0 %v2189
        %2240 = vmatprep.subr.mxu0 0.0
        %2241 = vmatpush1.xpose.msra.mxu0 %v2188
        %2242 = vmatprep.subr.mxu0 0.0
        %2243 = vmatpush1.xpose.msra.mxu0 %v2187
        %2244 = vmatprep.subr.mxu0 0.0
        %2245 = vmatpush1.xpose.msra.mxu0 %v2186
        %2246 = vmatprep.subr.mxu0 0.0
        %2247 = vmatpush1.xpose.msra.mxu0 %v2185
        %2248 = vmatprep.subr.mxu0 0.0
        %2249 = vmatpush1.xpose.msra.mxu0 %v2184
        %2250 = vmatprep.subr.mxu0 0.0
        %2251 = vmatpush1.xpose.msra.mxu0 %v2183
        %2252 = vmatprep.subr.mxu0 0.0
        %2253 = vmatpush1.xpose.msra.mxu0 %v2182
        %2254 = vmatprep.subr.mxu0 0.0
        %2255 = vmatpush1.xpose.msra.mxu0 %v2181
        %2256 = vmatprep.subr.mxu0 0.0
        %2257 = vmatpush1.xpose.msra.mxu0 %v2180
        %2258 = vmatprep.subr.mxu0 0.0
        %2259 = vmatpush1.xpose.msra.mxu0 %v2179
        %2260 = vmatprep.subr.mxu0 0.0
        %2261 = vmatpush1.xpose.msra.mxu0 %v2178
        %2262 = vmatprep.subr.mxu0 0.0
        %2263 = vmatpush1.xpose.msra.mxu0 %v2177
        %2264 = vmatprep.subr.mxu0 0.0
        %2265 = vmatpush1.xpose.msra.mxu0 %v2176
        %2266 = vmatprep.subr.mxu0 0.0
        %2267 = vmatpush1.xpose.msra.mxu0 %v2175
        %2268 = vmatprep.subr.mxu0 0.0
        %2269 = vmatpush1.xpose.msra.mxu0 %v2174
        %2270 = vmatprep.subr.mxu0 0.0
        %2271 = vmatpush2.xpose.msra.mxu0 0.0
        %2272 = vmatprep.subr.mxu0 0.0
        %2273 = vmatpush2.xpose.msra.mxu0 0.0
        %2274 = vmatprep.subr.mxu0 0.0
        %2275 = vmatpush2.xpose.msra.mxu0 0.0
        %2276 = vmatprep.subr.mxu0 0.0
        %2277 = vmatpush2.xpose.msra.mxu0 0.0
        %2278 = vmatprep.subr.mxu0 0.0
        %2279 = vmatpush2.xpose.msra.mxu0 0.0
        %2280 = vmatprep.subr.mxu0 0.0
        %2281 = vmatpush2.xpose.msra.mxu0 0.0
        %2282 = vmatprep.subr.mxu0 0.0
        %2283 = vmatpush2.xpose.msra.mxu0 0.0
        %2284 = vmatprep.subr.mxu0 0.0
        %2285 = vmatpush2.xpose.msra.mxu0 0.0
        %2286 = vmatprep.subr.mxu0 0.0
        %2287 = vmatpush2.xpose.msra.mxu0 0.0
        %2288 = vmatprep.subr.mxu0 0.0
        %2289 = vmatpush2.xpose.msra.mxu0 0.0
        %2290 = vmatprep.subr.mxu0 0.0
        %2291 = vmatpush2.xpose.msra.mxu0 0.0
        %2292 = vmatprep.subr.mxu0 0.0
        %2293 = vmatpush2.xpose.msra.mxu0 0.0
        %2294 = vmatprep.subr.mxu0 0.0
        %2295 = vmatpush2.xpose.msra.mxu0 0.0
        %2296 = vmatprep.subr.mxu0 0.0
        %2297 = vmatpush2.xpose.msra.mxu0 0.0
        %2298 = vmatprep.subr.mxu0 0.0
        %2299 = vmatpush2.xpose.msra.mxu0 0.0
        %2300 = vmatprep.subr.mxu0 0.0
        %2301 = vmatpush2.xpose.msra.mxu0 0.0
        %2302 = vmatprep.mubr.f32.mxu0 0.0
        %2303 = vmatmul.mubr.f32.gmra.mxu0 %v620
        %v2304 = vpop.f32.mrf.mxu0
        %v2305 = vadd.f32 0.0, %v2304
        %v2306 = vpop.f32.mrf.mxu0
        %2307 = vmatprep.mubr.f32.mxu0 0.0
        %2308 = vmatmul.mubr.f32.gmra.mxu0 %v625
        %v2309 = vpop.f32.mrf.mxu0
        %v2310 = vadd.f32 0.0, %v2309
        %v2311 = vpop.f32.mrf.mxu0
        %2312 = vmatprep.mubr.f32.mxu0 0.0
        %2313 = vmatmul.mubr.f32.gmra.mxu0 %v630
        %v2314 = vpop.f32.mrf.mxu0
        %v2315 = vadd.f32 0.0, %v2314
        %v2316 = vpop.f32.mrf.mxu0
        %2317 = vmatprep.mubr.f32.mxu0 0.0
        %2318 = vmatmul.mubr.f32.gmra.mxu0 %v635
        %v2319 = vpop.f32.mrf.mxu0
        %v2320 = vadd.f32 0.0, %v2319
        %v2321 = vpop.f32.mrf.mxu0
        %2322 = vdwg.mxu0
        %2323 = vmatprep.subr.mxu0 0.0
        %2324 = vmatpush1.xpose.msra.mxu0 %v2205
        %2325 = vmatprep.subr.mxu0 0.0
        %2326 = vmatpush1.xpose.msra.mxu0 %v2204
        %2327 = vmatprep.subr.mxu0 0.0
        %2328 = vmatpush1.xpose.msra.mxu0 %v2203
        %2329 = vmatprep.subr.mxu0 0.0
        %2330 = vmatpush1.xpose.msra.mxu0 %v2202
        %2331 = vmatprep.subr.mxu0 0.0
        %2332 = vmatpush1.xpose.msra.mxu0 %v2201
        %2333 = vmatprep.subr.mxu0 0.0
        %2334 = vmatpush1.xpose.msra.mxu0 %v2200
        %2335 = vmatprep.subr.mxu0 0.0
        %2336 = vmatpush1.xpose.msra.mxu0 %v2199
        %2337 = vmatprep.subr.mxu0 0.0
        %2338 = vmatpush1.xpose.msra.mxu0 %v2198
        %2339 = vmatprep.subr.mxu0 0.0
        %2340 = vmatpush1.xpose.msra.mxu0 %v2197
        %2341 = vmatprep.subr.mxu0 0.0
        %2342 = vmatpush1.xpose.msra.mxu0 %v2196
        %2343 = vmatprep.subr.mxu0 0.0
        %2344 = vmatpush1.xpose.msra.mxu0 %v2195
        %2345 = vmatprep.subr.mxu0 0.0
        %2346 = vmatpush1.xpose.msra.mxu0 %v2194
        %2347 = vmatprep.subr.mxu0 0.0
        %2348 = vmatpush1.xpose.msra.mxu0 %v2193
        %2349 = vmatprep.subr.mxu0 0.0
        %2350 = vmatpush1.xpose.msra.mxu0 %v2192
        %2351 = vmatprep.subr.mxu0 0.0
        %2352 = vmatpush1.xpose.msra.mxu0 %v2191
        %2353 = vmatprep.subr.mxu0 0.0
        %2354 = vmatpush1.xpose.msra.mxu0 %v2190
        %2355 = vmatprep.subr.mxu0 0.0
        %2356 = vmatpush2.xpose.msra.mxu0 0.0
        %2357 = vmatprep.subr.mxu0 0.0
        %2358 = vmatpush2.xpose.msra.mxu0 0.0
        %2359 = vmatprep.subr.mxu0 0.0
        %2360 = vmatpush2.xpose.msra.mxu0 0.0
        %2361 = vmatprep.subr.mxu0 0.0
        %2362 = vmatpush2.xpose.msra.mxu0 0.0
        %2363 = vmatprep.subr.mxu0 0.0
        %2364 = vmatpush2.xpose.msra.mxu0 0.0
        %2365 = vmatprep.subr.mxu0 0.0
        %2366 = vmatpush2.xpose.msra.mxu0 0.0
        %2367 = vmatprep.subr.mxu0 0.0
        %2368 = vmatpush2.xpose.msra.mxu0 0.0
        %2369 = vmatprep.subr.mxu0 0.0
        %2370 = vmatpush2.xpose.msra.mxu0 0.0
        %2371 = vmatprep.subr.mxu0 0.0
        %2372 = vmatpush2.xpose.msra.mxu0 0.0
        %2373 = vmatprep.subr.mxu0 0.0
        %2374 = vmatpush2.xpose.msra.mxu0 0.0
        %2375 = vmatprep.subr.mxu0 0.0
        %2376 = vmatpush2.xpose.msra.mxu0 0.0
        %2377 = vmatprep.subr.mxu0 0.0
        %2378 = vmatpush2.xpose.msra.mxu0 0.0
        %2379 = vmatprep.subr.mxu0 0.0
        %2380 = vmatpush2.xpose.msra.mxu0 0.0
        %2381 = vmatprep.subr.mxu0 0.0
        %2382 = vmatpush2.xpose.msra.mxu0 0.0
        %2383 = vmatprep.subr.mxu0 0.0
        %2384 = vmatpush2.xpose.msra.mxu0 0.0
        %2385 = vmatprep.subr.mxu0 0.0
        %2386 = vmatpush2.xpose.msra.mxu0 0.0
        %2387 = vmatprep.mubr.f32.mxu0 0.0
        %2388 = vmatmul.mubr.f32.gmra.mxu0 %v640
        %v2389 = vpop.f32.mrf.mxu0
        %v2390 = vadd.f32 0.0, %v2389
        %v2391 = vpop.f32.mrf.mxu0
        %2392 = vmatprep.mubr.f32.mxu0 0.0
        %2393 = vmatmul.mubr.f32.gmra.mxu0 %v645
        %v2394 = vpop.f32.mrf.mxu0
        %v2395 = vadd.f32 0.0, %v2394
        %v2396 = vpop.f32.mrf.mxu0
        %2397 = vmatprep.mubr.f32.mxu0 0.0
        %2398 = vmatmul.mubr.f32.gmra.mxu0 %v650
        %v2399 = vpop.f32.mrf.mxu0
        %v2400 = vadd.f32 0.0, %v2399
        %v2401 = vpop.f32.mrf.mxu0
        %2402 = vmatprep.mubr.f32.mxu0 0.0
        %2403 = vmatmul.mubr.f32.gmra.mxu0 %v655
        %v2404 = vpop.f32.mrf.mxu0
        %v2405 = vadd.f32 0.0, %v2404
        %v2406 = vpop.f32.mrf.mxu0
        %2407 = vdwg.mxu0
        %2408 = vmatprep.subr.mxu0 0.0
        %2409 = vmatpush1.xpose.msra.mxu0 %v2221
        %2410 = vmatprep.subr.mxu0 0.0
        %2411 = vmatpush1.xpose.msra.mxu0 %v2220
        %2412 = vmatprep.subr.mxu0 0.0
        %2413 = vmatpush1.xpose.msra.mxu0 %v2219
        %2414 = vmatprep.subr.mxu0 0.0
        %2415 = vmatpush1.xpose.msra.mxu0 %v2218
        %2416 = vmatprep.subr.mxu0 0.0
        %2417 = vmatpush1.xpose.msra.mxu0 %v2217
        %2418 = vmatprep.subr.mxu0 0.0
        %2419 = vmatpush1.xpose.msra.mxu0 %v2216
        %2420 = vmatprep.subr.mxu0 0.0
        %2421 = vmatpush1.xpose.msra.mxu0 %v2215
        %2422 = vmatprep.subr.mxu0 0.0
        %2423 = vmatpush1.xpose.msra.mxu0 %v2214
        %2424 = vmatprep.subr.mxu0 0.0
        %2425 = vmatpush1.xpose.msra.mxu0 %v2213
        %2426 = vmatprep.subr.mxu0 0.0
        %2427 = vmatpush1.xpose.msra.mxu0 %v2212
        %2428 = vmatprep.subr.mxu0 0.0
        %2429 = vmatpush1.xpose.msra.mxu0 %v2211
        %2430 = vmatprep.subr.mxu0 0.0
        %2431 = vmatpush1.xpose.msra.mxu0 %v2210
        %2432 = vmatprep.subr.mxu0 0.0
        %2433 = vmatpush1.xpose.msra.mxu0 %v2209
        %2434 = vmatprep.subr.mxu0 0.0
        %2435 = vmatpush1.xpose.msra.mxu0 %v2208
        %2436 = vmatprep.subr.mxu0 0.0
        %2437 = vmatpush1.xpose.msra.mxu0 %v2207
        %2438 = vmatprep.subr.mxu0 0.0
        %2439 = vmatpush1.xpose.msra.mxu0 %v2206
        %2440 = vmatprep.subr.mxu0 0.0
        %2441 = vmatpush2.xpose.msra.mxu0 0.0
        %2442 = vmatprep.subr.mxu0 0.0
        %2443 = vmatpush2.xpose.msra.mxu0 0.0
        %2444 = vmatprep.subr.mxu0 0.0
        %2445 = vmatpush2.xpose.msra.mxu0 0.0
        %2446 = vmatprep.subr.mxu0 0.0
        %2447 = vmatpush2.xpose.msra.mxu0 0.0
        %2448 = vmatprep.subr.mxu0 0.0
        %2449 = vmatpush2.xpose.msra.mxu0 0.0
        %2450 = vmatprep.subr.mxu0 0.0
        %2451 = vmatpush2.xpose.msra.mxu0 0.0
        %2452 = vmatprep.subr.mxu0 0.0
        %2453 = vmatpush2.xpose.msra.mxu0 0.0
        %2454 = vmatprep.subr.mxu0 0.0
        %2455 = vmatpush2.xpose.msra.mxu0 0.0
        %2456 = vmatprep.subr.mxu0 0.0
        %2457 = vmatpush2.xpose.msra.mxu0 0.0
        %2458 = vmatprep.subr.mxu0 0.0
        %2459 = vmatpush2.xpose.msra.mxu0 0.0
        %2460 = vmatprep.subr.mxu0 0.0
        %2461 = vmatpush2.xpose.msra.mxu0 0.0
        %2462 = vmatprep.subr.mxu0 0.0
        %2463 = vmatpush2.xpose.msra.mxu0 0.0
        %2464 = vmatprep.subr.mxu0 0.0
        %2465 = vmatpush2.xpose.msra.mxu0 0.0
        %2466 = vmatprep.subr.mxu0 0.0
        %2467 = vmatpush2.xpose.msra.mxu0 0.0
        %2468 = vmatprep.subr.mxu0 0.0
        %2469 = vmatpush2.xpose.msra.mxu0 0.0
        %2470 = vmatprep.subr.mxu0 0.0
        %2471 = vmatpush2.xpose.msra.mxu0 0.0
        %2472 = vmatprep.mubr.f32.mxu0 0.0
        %2473 = vmatmul.mubr.f32.gmra.mxu0 %v660
        %v2474 = vpop.f32.mrf.mxu0
        %v2475 = vadd.f32 0.0, %v2474
        %v2476 = vpop.f32.mrf.mxu0
        %2477 = vmatprep.mubr.f32.mxu0 0.0
        %2478 = vmatmul.mubr.f32.gmra.mxu0 %v665
        %v2479 = vpop.f32.mrf.mxu0
        %v2480 = vadd.f32 0.0, %v2479
        %v2481 = vpop.f32.mrf.mxu0
        %2482 = vmatprep.mubr.f32.mxu0 0.0
        %2483 = vmatmul.mubr.f32.gmra.mxu0 %v670
        %v2484 = vpop.f32.mrf.mxu0
        %v2485 = vadd.f32 0.0, %v2484
        %v2486 = vpop.f32.mrf.mxu0
        %2487 = vmatprep.mubr.f32.mxu0 0.0
        %2488 = vmatmul.mubr.f32.gmra.mxu0 %v675
        %v2489 = vpop.f32.mrf.mxu0
        %v2490 = vadd.f32 0.0, %v2489
        %v2491 = vpop.f32.mrf.mxu0
        %2492 = vdwg.mxu0
        %2493 = vmatprep.subr.mxu0 0.0
        %2494 = vmatpush1.xpose.msra.mxu0 %v2237
        %2495 = vmatprep.subr.mxu0 0.0
        %2496 = vmatpush1.xpose.msra.mxu0 %v2236
        %2497 = vmatprep.subr.mxu0 0.0
        %2498 = vmatpush1.xpose.msra.mxu0 %v2235
        %2499 = vmatprep.subr.mxu0 0.0
        %2500 = vmatpush1.xpose.msra.mxu0 %v2234
        %2501 = vmatprep.subr.mxu0 0.0
        %2502 = vmatpush1.xpose.msra.mxu0 %v2233
        %2503 = vmatprep.subr.mxu0 0.0
        %2504 = vmatpush1.xpose.msra.mxu0 %v2232
        %2505 = vmatprep.subr.mxu0 0.0
        %2506 = vmatpush1.xpose.msra.mxu0 %v2231
        %2507 = vmatprep.subr.mxu0 0.0
        %2508 = vmatpush1.xpose.msra.mxu0 %v2230
        %2509 = vmatprep.subr.mxu0 0.0
        %2510 = vmatpush1.xpose.msra.mxu0 %v2229
        %2511 = vmatprep.subr.mxu0 0.0
        %2512 = vmatpush1.xpose.msra.mxu0 %v2228
        %2513 = vmatprep.subr.mxu0 0.0
        %2514 = vmatpush1.xpose.msra.mxu0 %v2227
        %2515 = vmatprep.subr.mxu0 0.0
        %2516 = vmatpush1.xpose.msra.mxu0 %v2226
        %2517 = vmatprep.subr.mxu0 0.0
        %2518 = vmatpush1.xpose.msra.mxu0 %v2225
        %2519 = vmatprep.subr.mxu0 0.0
        %2520 = vmatpush1.xpose.msra.mxu0 %v2224
        %2521 = vmatprep.subr.mxu0 0.0
        %2522 = vmatpush1.xpose.msra.mxu0 %v2223
        %2523 = vmatprep.subr.mxu0 0.0
        %2524 = vmatpush1.xpose.msra.mxu0 %v2222
        %2525 = vmatprep.subr.mxu0 0.0
        %2526 = vmatpush2.xpose.msra.mxu0 0.0
        %2527 = vmatprep.subr.mxu0 0.0
        %2528 = vmatpush2.xpose.msra.mxu0 0.0
        %2529 = vmatprep.subr.mxu0 0.0
        %2530 = vmatpush2.xpose.msra.mxu0 0.0
        %2531 = vmatprep.subr.mxu0 0.0
        %2532 = vmatpush2.xpose.msra.mxu0 0.0
        %2533 = vmatprep.subr.mxu0 0.0
        %2534 = vmatpush2.xpose.msra.mxu0 0.0
        %2535 = vmatprep.subr.mxu0 0.0
        %2536 = vmatpush2.xpose.msra.mxu0 0.0
        %2537 = vmatprep.subr.mxu0 0.0
        %2538 = vmatpush2.xpose.msra.mxu0 0.0
        %2539 = vmatprep.subr.mxu0 0.0
        %2540 = vmatpush2.xpose.msra.mxu0 0.0
        %2541 = vmatprep.subr.mxu0 0.0
        %2542 = vmatpush2.xpose.msra.mxu0 0.0
        %2543 = vmatprep.subr.mxu0 0.0
        %2544 = vmatpush2.xpose.msra.mxu0 0.0
        %2545 = vmatprep.subr.mxu0 0.0
        %2546 = vmatpush2.xpose.msra.mxu0 0.0
        %2547 = vmatprep.subr.mxu0 0.0
        %2548 = vmatpush2.xpose.msra.mxu0 0.0
        %2549 = vmatprep.subr.mxu0 0.0
        %2550 = vmatpush2.xpose.msra.mxu0 0.0
        %2551 = vmatprep.subr.mxu0 0.0
        %2552 = vmatpush2.xpose.msra.mxu0 0.0
        %2553 = vmatprep.subr.mxu0 0.0
        %2554 = vmatpush2.xpose.msra.mxu0 0.0
        %2555 = vmatprep.subr.mxu0 0.0
        %2556 = vmatpush2.xpose.msra.mxu0 0.0
        %2557 = vmatprep.mubr.f32.mxu0 0.0
        %2558 = vmatmul.mubr.f32.gmra.mxu0 %v680
        %v2559 = vpop.f32.mrf.mxu0
        %v2560 = vadd.f32 0.0, %v2559
        %v2561 = vpop.f32.mrf.mxu0
        %2562 = vmatprep.mubr.f32.mxu0 0.0
        %2563 = vmatmul.mubr.f32.gmra.mxu0 %v685
        %v2564 = vpop.f32.mrf.mxu0
        %v2565 = vadd.f32 0.0, %v2564
        %v2566 = vpop.f32.mrf.mxu0
        %2567 = vmatprep.mubr.f32.mxu0 0.0
        %2568 = vmatmul.mubr.f32.gmra.mxu0 %v690
        %v2569 = vpop.f32.mrf.mxu0
        %v2570 = vadd.f32 0.0, %v2569
        %v2571 = vpop.f32.mrf.mxu0
        %2572 = vmatprep.mubr.f32.mxu0 0.0
        %2573 = vmatmul.mubr.f32.gmra.mxu0 %v695
        %v2574 = vpop.f32.mrf.mxu0
        %v2575 = vadd.f32 0.0, %v2574
        %v2576 = vpop.f32.mrf.mxu0
        %2577 = vdwg.mxu0
        %v2578 = vld [vmem:[%s2] sm:$0xff]
        %v2579 = vld [vmem:[%s2 + $0x8] sm:$0xff]
        %v2580 = vld [vmem:[%s2 + $0x10] sm:$0xff]
        %v2581 = vld [vmem:[%s2 + $0x18] sm:$0xff]
        %v2582 = vld [vmem:[%s3] sm:$0xff]
        %v2583 = vld [vmem:[%s3 + $0x8] sm:$0xff]
        %v2584 = vld [vmem:[%s3 + $0x10] sm:$0xff]
        %v2585 = vld [vmem:[%s3 + $0x18] sm:$0xff]
        %2587 = vset.pattern.permute.xlu0 0
        %2588 = vperm.xlu0 %2587, %v2582
        %v2589 = vpop.permute.xlu0 %2588
        %2592 = vset.pattern.permute.xlu0 0
        %2593 = vperm.xlu0 %2592, %v2583
        %v2594 = vpop.permute.xlu0 %2593
        %2597 = vset.pattern.permute.xlu0 0
        %2598 = vperm.xlu0 %2597, %v2584
        %v2599 = vpop.permute.xlu0 %2598
        %2602 = vset.pattern.permute.xlu0 0
        %2603 = vperm.xlu0 %2602, %v2585
        %v2604 = vpop.permute.xlu0 %2603
        %2606 = vmatprep.subr.mxu0 0.0
        %2607 = vmatpush1.msra.mxu0 %v2575
        %2608 = vmatprep.subr.mxu0 0.0
        %2609 = vmatpush1.msra.mxu0 %v2570
        %2610 = vmatprep.subr.mxu0 0.0
        %2611 = vmatpush1.msra.mxu0 %v2565
        %2612 = vmatprep.subr.mxu0 0.0
        %2613 = vmatpush1.msra.mxu0 %v2560
        %2614 = vmatprep.subr.mxu0 0.0
        %2615 = vmatpush1.msra.mxu0 %v2490
        %2616 = vmatprep.subr.mxu0 0.0
        %2617 = vmatpush1.msra.mxu0 %v2485
        %2618 = vmatprep.subr.mxu0 0.0
        %2619 = vmatpush1.msra.mxu0 %v2480
        %2620 = vmatprep.subr.mxu0 0.0
        %2621 = vmatpush1.msra.mxu0 %v2475
        %2622 = vmatprep.subr.mxu0 0.0
        %2623 = vmatpush1.msra.mxu0 %v2405
        %2624 = vmatprep.subr.mxu0 0.0
        %2625 = vmatpush1.msra.mxu0 %v2400
        %2626 = vmatprep.subr.mxu0 0.0
        %2627 = vmatpush1.msra.mxu0 %v2395
        %2628 = vmatprep.subr.mxu0 0.0
        %2629 = vmatpush1.msra.mxu0 %v2390
        %2630 = vmatprep.subr.mxu0 0.0
        %2631 = vmatpush1.msra.mxu0 %v2320
        %2632 = vmatprep.subr.mxu0 0.0
        %2633 = vmatpush1.msra.mxu0 %v2315
        %2634 = vmatprep.subr.mxu0 0.0
        %2635 = vmatpush1.msra.mxu0 %v2310
        %2636 = vmatprep.subr.mxu0 0.0
        %2637 = vmatpush1.msra.mxu0 %v2305
        %2638 = vmatprep.subr.mxu0 0.0
        %2639 = vmatpush2.msra.mxu0 0.0
        %2640 = vmatprep.subr.mxu0 0.0
        %2641 = vmatpush2.msra.mxu0 0.0
        %2642 = vmatprep.subr.mxu0 0.0
        %2643 = vmatpush2.msra.mxu0 0.0
        %2644 = vmatprep.subr.mxu0 0.0
        %2645 = vmatpush2.msra.mxu0 0.0
        %2646 = vmatprep.subr.mxu0 0.0
        %2647 = vmatpush2.msra.mxu0 0.0
        %2648 = vmatprep.subr.mxu0 0.0
        %2649 = vmatpush2.msra.mxu0 0.0
        %2650 = vmatprep.subr.mxu0 0.0
        %2651 = vmatpush2.msra.mxu0 0.0
        %2652 = vmatprep.subr.mxu0 0.0
        %2653 = vmatpush2.msra.mxu0 0.0
        %2654 = vmatprep.subr.mxu0 0.0
        %2655 = vmatpush2.msra.mxu0 0.0
        %2656 = vmatprep.subr.mxu0 0.0
        %2657 = vmatpush2.msra.mxu0 0.0
        %2658 = vmatprep.subr.mxu0 0.0
        %2659 = vmatpush2.msra.mxu0 0.0
        %2660 = vmatprep.subr.mxu0 0.0
        %2661 = vmatpush2.msra.mxu0 0.0
        %2662 = vmatprep.subr.mxu0 0.0
        %2663 = vmatpush2.msra.mxu0 0.0
        %2664 = vmatprep.subr.mxu0 0.0
        %2665 = vmatpush2.msra.mxu0 0.0
        %2666 = vmatprep.subr.mxu0 0.0
        %2667 = vmatpush2.msra.mxu0 0.0
        %2668 = vmatprep.subr.mxu0 0.0
        %2669 = vmatpush2.msra.mxu0 0.0
        %2670 = vmatprep.mubr.f32.mxu0 0.0
        %2671 = vmatmul.mubr.f32.gmra.mxu0 %v2578
        %v2672 = vpop.f32.mrf.mxu0
        %v2673 = vadd.f32 %v2589, %v2672
        %v2674 = vpop.f32.mrf.mxu0
        %2675 = vmatprep.mubr.f32.mxu0 0.0
        %2676 = vmatmul.mubr.f32.gmra.mxu0 %v2579
        %v2677 = vpop.f32.mrf.mxu0
        %v2678 = vadd.f32 %v2594, %v2677
        %v2679 = vpop.f32.mrf.mxu0
        %2680 = vmatprep.mubr.f32.mxu0 0.0
        %2681 = vmatmul.mubr.f32.gmra.mxu0 %v2580
        %v2682 = vpop.f32.mrf.mxu0
        %v2683 = vadd.f32 %v2599, %v2682
        %v2684 = vpop.f32.mrf.mxu0
        %2685 = vmatprep.mubr.f32.mxu0 0.0
        %2686 = vmatmul.mubr.f32.gmra.mxu0 %v2581
        %v2687 = vpop.f32.mrf.mxu0
        %v2688 = vadd.f32 %v2604, %v2687
        %v2689 = vpop.f32.mrf.mxu0
        %2690 = vdwg.mxu0
        %v2691 = vadd.f32 %v2673, %v196
        %v2692 = vadd.f32 %v2678, %v197
        %v2693 = vadd.f32 %v2683, %v198
        %v2694 = vadd.f32 %v2688, %v199
        %2695 = vst [vmem:[%s190] sm:$0xff] %v2691
        %2696 = vst [vmem:[%s190 + $0x8] sm:$0xff] %v2692
        %2697 = vst [vmem:[%s190 + $0x10] sm:$0xff] %v2693
        %2698 = vst [vmem:[%s190 + $0x18] sm:$0xff] %v2694
        %s2699 = sand.u32 %s115, 1
        %s2700 = scalar_lea.sflag [#allocation3], %s2699
        %s2701 = sand.u32 %s115, 1
        %s2702 = smul.addr %s2701, 32
        %s2703 = scalar_lea.vmem [#allocation2], %s2702
        // Predicated region
        $region37: #{tpu_custom_call.1} parent=35 // pred_check
          %p2704 = pneg %p125
        $region38: #{tpu_custom_call.1} parent=35 // pred_check_branch
          %2706 = sbr.rel (%p2704) target = $region40
        $region39: #{tpu_custom_call.1} parent=35 // pred_region
          %s2708 = ssub.s32 512, 512
          %2709 = vsyncadd %s2700, %s2708
          %s2710 = smul.addr %s18, 4
          %s2711 = smul.addr %s2710, 128
          %s2712 = scalar_lea.hbm %s4, %s2711
          %s2713 = sshll.u32 %s2703, 4
          %s2714 = int_to_ptr.vmem [resolvable:$true] %s2713
          %2719 = dma.vmem_to_hbm [thread:$0]  %s2714, 512, %s2712, %s2700, 128, 128, 8
        $region40: #{tpu_custom_call.1} parent=35 // pred_fallthru
          _
      $region36: #{tpu_custom_call.1} parent=5 // pred_fallthru
        _
      %p2720 = scmp.le.s32.totalorder 2, %s13
      // Predicated region
      $region41: #{tpu_custom_call.1} parent=5 // pred_check
        %p2721 = pneg %p2720
      $region42: #{tpu_custom_call.1} parent=5 // pred_check_branch
        %2723 = sbr.rel (%p2721) target = $region44
      $region43: #{tpu_custom_call.1} parent=5 // pred_region
        %s2724 = ssub.s32 %s13, 2
        // Predicated region
        $region45: #{tpu_custom_call.1} parent=43 // pred_check
          %p2725 = pneg %p131
        $region46: #{tpu_custom_call.1} parent=43 // pred_check_branch
          %2727 = sbr.rel (%p2725) target = $region48
        $region47: #{tpu_custom_call.1} parent=43 // pred_region
          %s2728 = sand.u32 %s116, 1
          %s2729 = scalar_lea.sflag [#allocation3], %s2728
          %s2730 = sand.u32 %s116, 1
          %s2731 = smul.addr %s2730, 32
          %s2732 = scalar_lea.vmem [#allocation2], %s2731
          %2733 = dma.done %s2729, 512
        $region48: #{tpu_custom_call.1} parent=43 // pred_fallthru
          _
      $region44: #{tpu_custom_call.1} parent=5 // pred_fallthru
        _
    $region6: #{tpu_custom_call.1} parent=1 // loop_footer
      %s17 = sadd.s32 1, %s13
    $region7: #{tpu_custom_call.1} parent=1 // loop_footer_branch
      %12 = sbr.rel target = $region3
    $region8: #{tpu_custom_call.1} parent=1 // loop_exit
      _
    %2734 = vsyncpa [#allocation3], 1
    %s2735 = scalar_lea.sflag [#allocation3], 1
    %2736 = vsyncpa %s2735, 1

</llo_original>
